<compile_context>
chip_gen: v7x
topology: tpu7x:2x2x1
jax: 0.10.0
libtpu: 0.0.40
codegen_flags: <defaults>
</compile_context>

<pallas_src>
import functools
import math

import jax
import jax.numpy as jnp
from jax import lax
from jax.experimental import pallas as pl
from jax.experimental.pallas import tpu as pltpu


def _silu(y):
    # Exact SiLU in f32 (exp on the EUP); matches the PyTorch module closely.
    return y / (1.0 + jnp.exp(-y))


def _pick_chunk(H, W, target):
    """Lane-chunk size: multiple of W (keeps the column mask loop-invariant)
    and of 128 (lane-aligned chunk stores), close to `target` lanes."""
    HW = H * W
    if HW <= 2 * target:
        return HW
    step = W * (128 // math.gcd(W, 128))          # lcm(W, 128)
    if step > HW:
        return HW
    return min(max(1, target // step) * step, HW)


# ---------------------------------------------------------------------------
# Fused MSGConv kernel (one grid step == one batch image)
# ---------------------------------------------------------------------------
def _msgconv_kernel(x_ref, w1_ref, s1_ref, b1_ref,
                    dww_ref, dws_ref, dwb_ref,
                    w2_ref, s2_ref, b2_ref,
                    o_ref, ypad_ref,
                    *, H, W, kmax, chunk, lane_off):
    P = kmax // 2
    HW = H * W
    kk = kmax * kmax
    min_ch = s1_ref.shape[0]
    Wtot = ypad_ref.shape[1]
    mxdt = w1_ref.dtype

    # ---- hoisted, loop-invariant parameter loads ----------------------------
    w1 = w1_ref[...]                                   # [min_ch, C1]  (bf16)
    s1, b1 = s1_ref[...], b1_ref[...]                  # [min_ch, 1]   (f32)
    wtaps = [dww_ref[t] for t in range(kk)]            # kk x [min_ch, 1] f32
    dws, dwb = dws_ref[...], dwb_ref[...]
    w2 = w2_ref[...]                                   # [C2, C2]      (bf16)
    s2, b2 = s2_ref[...], b2_ref[...]                  # [C2, 1]       (f32)

    # ---- zero ONLY the halo columns (data region is fully overwritten) ------
    ypad_ref[:, :lane_off] = jnp.zeros((min_ch, lane_off), jnp.float32)
    ypad_ref[:, lane_off + HW:] = jnp.zeros(
        (min_ch, Wtot - lane_off - HW), jnp.float32)

    # ---- pass 1: cv1 1x1 conv + folded BN + SiLU, chunked over lanes --------
    def cv1_chunk(c0, size):
        xc = x_ref[:, pl.ds(c0, size)].astype(mxdt)
        y = jnp.dot(w1, xc, preferred_element_type=jnp.float32)
        # lane_off is a multiple of 128 -> lane-aligned store when c0 is too.
        ypad_ref[:, pl.ds(lane_off + c0, size)] = _silu(y * s1 + b1)

    # ---- pass 2: fused depthwise (3x3 & 5x5) + folded concat + cv2 ----------
    def dw_chunk(c0, size, masks):
        acc = jnp.zeros((min_ch, size), jnp.float32)
        for dx in range(kmax):                         # static unroll
            ox = dx - P
            contrib = jnp.zeros((min_ch, size), jnp.float32)
            for dy in range(kmax):
                oy = dy - P
                start = lane_off + c0 + oy * W + ox
                contrib = contrib + ypad_ref[:, pl.ds(start, size)] * wtaps[dy * kmax + dx]
            if masks[dx] is None:
                acc = acc + contrib
            else:                                      # horizontal zero-padding
                acc = acc + jnp.where(masks[dx], contrib, 0.0)
        y2c = _silu(acc * dws + dwb)                   # [min_ch, size]
        y1c = ypad_ref[:, pl.ds(lane_off + c0, size)]  # aligned re-read of x1

        if min_ch % 8 == 0 and min_ch < 128:
            # Sublane concat is cheap here; one MXU pass with K = C2 instead of
            # two half-empty-K matmuls.
            yc = jnp.concatenate([y1c, y2c], axis=0).astype(mxdt)
            out = jnp.dot(w2, yc, preferred_element_type=jnp.float32)
        else:
            out = (jnp.dot(w2[:, :min_ch], y1c.astype(mxdt),
                           preferred_element_type=jnp.float32)
                   + jnp.dot(w2[:, min_ch:], y2c.astype(mxdt),
                             preferred_element_type=jnp.float32))
        out = _silu(out * s2 + b2)                     # [C2, size]
        o_ref[:, pl.ds(c0, size)] = out.astype(o_ref.dtype)

    def ox_masks(size):
        # Valid only because every chunk starts at a multiple of W.
        col = lax.broadcasted_iota(jnp.int32, (1, size), 1) % W
        ms = []
        for dx in range(kmax):
            ox = dx - P
            ms.append(None if ox == 0 else
                      jnp.logical_and(col + ox >= 0, col + ox < W))
        return ms

    if chunk >= HW:                                    # tiny image: one chunk
        cv1_chunk(0, HW)
        dw_chunk(0, HW, ox_masks(HW))
    else:
        n_full = HW // chunk
        rem = HW - n_full * chunk
        masks = ox_masks(chunk)                        # hoisted out of the loop

        def aligned(i):
            c0 = i * chunk
            return pl.multiple_of(c0, 128) if chunk % 128 == 0 else c0

        @pl.loop(0, n_full)
        def _(i):
            cv1_chunk(aligned(i), chunk)

        if rem:
            cv1_chunk(n_full * chunk, rem)

        @pl.loop(0, n_full)
        def _(i):
            dw_chunk(aligned(i), chunk, masks)

        if rem:
            dw_chunk(n_full * chunk, rem, ox_masks(rem))


def _full_spec(a):
    n = a.ndim
    return pl.BlockSpec(a.shape, lambda b, n=n: (0,) * n)


def msgconv_forward(x_nchw, params, *, io_dtype=jnp.bfloat16, chunk_target=1024):
    """MSGConv forward, NCHW in / NCHW out (matches the PyTorch module)."""
    B, C1, H, W = x_nchw.shape
    HW = H * W
    min_ch = params["s1"].shape[0]
    C2 = params["s2"].shape[0]
    kk = params["dww"].shape[0]
    kmax = int(round(kk ** 0.5))
    P = kmax // 2
    padL = P * (W + 1)                                 # covers all tap offsets
    lane_off = ((padL + 127) // 128) * 128             # lane-aligned y1 base
    Wtot = lane_off + ((HW + padL + 127) // 128) * 128
    chunk = _pick_chunk(H, W, chunk_target)

    if io_dtype is None:
        io_dtype = x_nchw.dtype
    mxu_dtype = jnp.bfloat16

    xf = x_nchw.reshape(B, C1, HW).astype(io_dtype)    # reshape is metadata-only

    plist = [
        params["w1"].astype(mxu_dtype),
        params["s1"].astype(jnp.float32), params["b1"].astype(jnp.float32),
        params["dww"].astype(jnp.float32),
        params["dws"].astype(jnp.float32), params["dwb"].astype(jnp.float32),
        params["w2"].astype(mxu_dtype),
        params["s2"].astype(jnp.float32), params["b2"].astype(jnp.float32),
    ]

    # ---- VMEM budget: double-buffered IO blocks + params + f32 halo scratch ----
    io_isz = jnp.dtype(io_dtype).itemsize
    param_bytes = sum(int(p.size) * p.dtype.itemsize for p in plist)
    need = (2 * C1 * HW * io_isz            # x block, double-buffered
            + 2 * C2 * HW * io_isz          # out block, double-buffered
            + min_ch * Wtot * 4             # halo scratch
            + 2 * param_bytes
            + 8 * 4 * min_ch * max(chunk, 128))   # chunk-local temporaries, generous
    vmem_cap = 64 * 1024 * 1024             # safe fallback (v7x physical)
    try:
        vmem_cap = int(pltpu.get_tpu_info().vmem_capacity_bytes)
    except Exception:
        pass
    vmem_limit = int(min(max(2 * need, 32 * 1024 * 1024), int(0.9 * vmem_cap)))

    flops = 2 * B * HW * (C1 * min_ch + min_ch * kk + C2 * C2)
    transcendentals = B * HW * (2 * min_ch + C2)
    bytes_accessed = (B * C1 * HW + B * C2 * HW) * io_isz + param_bytes

    kernel = functools.partial(_msgconv_kernel, H=H, W=W, kmax=kmax,
                               chunk=chunk, lane_off=lane_off)
    out = pl.pallas_call(
        kernel,
        out_shape=jax.ShapeDtypeStruct((B, C2, HW), io_dtype),
        grid=(B,),
        in_specs=[pl.BlockSpec((None, C1, HW), lambda b: (b, 0, 0))]
                 + [_full_spec(p) for p in plist],
        out_specs=pl.BlockSpec((None, C2, HW), lambda b: (b, 0, 0)),
        scratch_shapes=[pltpu.VMEM((min_ch, Wtot), jnp.float32)],
        compiler_params=pltpu.CompilerParams(
            dimension_semantics=("parallel",),         # batch across TCs (v7x)
            vmem_limit_bytes=vmem_limit,
        ),
        cost_estimate=pl.CostEstimate(
            flops=int(flops),
            transcendentals=int(transcendentals),
            bytes_accessed=int(bytes_accessed),
        ),
    )(xf, *plist)
    return out.reshape(B, C2, H, W).astype(x_nchw.dtype)


# ---------------------------------------------------------------------------
# Parameter construction (deterministic; eval-mode BN folded into scale/bias)
# ---------------------------------------------------------------------------
def _fold_bn(key, c, eps=1e-5):
    kg, kb, km, kv = jax.random.split(key, 4)
    gamma = 1.0 + 0.1 * jax.random.normal(kg, (c,), jnp.float32)
    beta = 0.1 * jax.random.normal(kb, (c,), jnp.float32)
    mean = 0.1 * jax.random.normal(km, (c,), jnp.float32)
    var = jnp.abs(jax.random.normal(kv, (c,), jnp.float32)) + 0.5
    scale = gamma / jnp.sqrt(var + eps)
    bias = beta - mean * scale
    return scale, bias


def init_msgconv_params(key, c1, c2, kernels=(3, 5)):
    assert c2 % 2 == 0, "c2 must be even (min_ch = c2 // 2)"
    min_ch = c2 // 2
    g = len(kernels)
    dwc = min_ch // g
    assert dwc * g == min_ch
    kmax = max(kernels)
    kk = kmax * kmax

    keys = jax.random.split(key, 2 + g)
    params = {}

    # cv1: 1x1 conv c1 -> min_ch (PyTorch weight [min_ch, c1, 1, 1] -> [min_ch, c1])
    k0a, k0b = jax.random.split(keys[0])
    params["w1"] = 0.1 * jax.random.normal(k0a, (min_ch, c1), jnp.float32)
    s, b = _fold_bn(k0b, min_ch)
    params["s1"], params["b1"] = s[:, None], b[:, None]

    # depthwise branches: Conv(dwc, dwc, k=ks, g=dwc); smaller kernels are
    # zero-padded (centered) into the kmax x kmax grid so both branches fuse.
    wfull_list, dws_list, dwb_list = [], [], []
    for i, ks in enumerate(kernels):
        kwa, kwb = jax.random.split(keys[1 + i])
        w = 0.1 * jax.random.normal(kwa, (dwc, ks, ks), jnp.float32)
        off = (kmax - ks) // 2
        wfull = jnp.zeros((dwc, kmax, kmax), jnp.float32)
        wfull = wfull.at[:, off:off + ks, off:off + ks].set(w)
        wfull_list.append(wfull)
        s, b = _fold_bn(kwb, dwc)
        dws_list.append(s)
        dwb_list.append(b)
    dw_full = jnp.concatenate(wfull_list, axis=0)                 # [min_ch, kmax, kmax]
    params["dww"] = dw_full.transpose(1, 2, 0).reshape(kk, min_ch)[:, :, None]
    params["dws"] = jnp.concatenate(dws_list)[:, None]
    params["dwb"] = jnp.concatenate(dwb_list)[:, None]

    # conv1x1: c2 -> c2 (channel concat folds into column blocks of w2).
    k2a, k2b = jax.random.split(keys[-1])
    params["w2"] = 0.1 * jax.random.normal(k2a, (c2, c2), jnp.float32)
    s, b = _fold_bn(k2b, c2)
    params["s2"], params["b2"] = s[:, None], b[:, None]
    return params


# ---------------------------------------------------------------------------
# Pure-JAX reference (f32, exact sigmoid) for a correctness sanity check
# ---------------------------------------------------------------------------
def msgconv_reference(x_nchw, params):
    def conv1x1_bn_silu(x, w, s, b):
        y = jnp.einsum("oc,bchw->bohw", w, x)
        y = y * s.reshape(1, -1, 1, 1) + b.reshape(1, -1, 1, 1)
        return y * jax.nn.sigmoid(y)

    x1 = conv1x1_bn_silu(x_nchw, params["w1"], params["s1"], params["b1"])
    min_ch = params["s1"].shape[0]
    kk = params["dww"].shape[0]
    kmax = int(round(kk ** 0.5))
    p = kmax // 2
    wdw = params["dww"][:, :, 0].reshape(kmax, kmax, min_ch).transpose(2, 0, 1)

    B, _, H, W = x1.shape
    xp = jnp.pad(x1, ((0, 0), (0, 0), (p, p), (p, p)))
    acc = jnp.zeros_like(x1)
    for dy in range(kmax):
        for dx in range(kmax):
            acc = acc + xp[:, :, dy:dy + H, dx:dx + W] * wdw[:, dy, dx].reshape(1, min_ch, 1, 1)
    y2 = acc * params["dws"].reshape(1, -1, 1, 1) + params["dwb"].reshape(1, -1, 1, 1)
    x2 = y2 * jax.nn.sigmoid(y2)

    xc = jnp.concatenate([x1, x2], axis=1)
    return conv1x1_bn_silu(xc, params["w2"], params["s2"], params["b2"])


if __name__ == "__main__":
    key = jax.random.PRNGKey(0)

    def check(B, C1, C2, H, W, chunk_target):
        kx, kp = jax.random.split(jax.random.fold_in(key, C1 * 1000 + C2))
        x = jax.random.normal(kx, (B, C1, H, W), jnp.float32)
        params = init_msgconv_params(kp, C1, C2, kernels=(3, 5))
        out = jax.block_until_ready(
            msgconv_forward(x, params, chunk_target=chunk_target))
        assert out.shape == (B, C2, H, W), out.shape
        ref = jax.block_until_ready(msgconv_reference(x, params))
        err = float(jnp.max(jnp.abs(out - ref)))
        assert err < 5e-2, f"max abs err vs reference: {err}"

    # Config A: tiny channels (min_ch=4 -> split-K cv2 path), whole image in a
    # single lane chunk.
    check(B=2, C1=4, C2=8, H=16, W=16, chunk_target=1024)
    # Config B: min_ch=8 (sublane-aligned concat + single cv2 matmul) with a
    # small chunk target so the in-kernel pl.loop spatial tiling is exercised.
    check(B=2, C1=8, C2=16, H=16, W=16, chunk_target=64)

    print("KERNEL_OK")
</pallas_src>

<mosaic_0001>
module attributes {stable_mosaic.version = 11 : i64} {
  func.func @_msgconv_kernel(%arg0: i32, %arg1: memref<1x4x256xbf16, #tpu.memory_space<vmem>>, %arg2: memref<4x4xbf16, #tpu.memory_space<vmem>>, %arg3: memref<4x1xf32, #tpu.memory_space<vmem>>, %arg4: memref<4x1xf32, #tpu.memory_space<vmem>>, %arg5: memref<25x4x1xf32, #tpu.memory_space<vmem>>, %arg6: memref<4x1xf32, #tpu.memory_space<vmem>>, %arg7: memref<4x1xf32, #tpu.memory_space<vmem>>, %arg8: memref<8x8xbf16, #tpu.memory_space<vmem>>, %arg9: memref<8x1xf32, #tpu.memory_space<vmem>>, %arg10: memref<8x1xf32, #tpu.memory_space<vmem>>, %arg11: memref<1x8x256xbf16, #tpu.memory_space<vmem>>, %arg12: memref<4x512xf32, #tpu.memory_space<vmem>>) attributes {dimension_semantics = [#tpu.dimension_semantics<parallel>], iteration_bounds = array<i64: 2>, scalar_prefetch = 0 : i64, scratch_operands = 1 : i64, tpu.core_type = #tpu.core_type<tc>, window_params = [{transform_indices = @transform_0, window_bounds = array<i64: 1, 4, 256>}, {pipeline_mode = #tpu.pipeline_mode<synchronous>, transform_indices = @transform_1, window_bounds = array<i64: 4, 4>}, {pipeline_mode = #tpu.pipeline_mode<synchronous>, transform_indices = @transform_2, window_bounds = array<i64: 4, 1>}, {pipeline_mode = #tpu.pipeline_mode<synchronous>, transform_indices = @transform_3, window_bounds = array<i64: 4, 1>}, {pipeline_mode = #tpu.pipeline_mode<synchronous>, transform_indices = @transform_4, window_bounds = array<i64: 25, 4, 1>}, {pipeline_mode = #tpu.pipeline_mode<synchronous>, transform_indices = @transform_5, window_bounds = array<i64: 4, 1>}, {pipeline_mode = #tpu.pipeline_mode<synchronous>, transform_indices = @transform_6, window_bounds = array<i64: 4, 1>}, {pipeline_mode = #tpu.pipeline_mode<synchronous>, transform_indices = @transform_7, window_bounds = array<i64: 8, 8>}, {pipeline_mode = #tpu.pipeline_mode<synchronous>, transform_indices = @transform_8, window_bounds = array<i64: 8, 1>}, {pipeline_mode = #tpu.pipeline_mode<synchronous>, transform_indices = @transform_9, window_bounds = array<i64: 8, 1>}, {transform_indices = @transform_10, window_bounds = array<i64: 1, 8, 256>}]} {
    %c0 = arith.constant 0 : index
    %c0_0 = arith.constant 0 : index
    %0 = vector.load %arg2[%c0, %c0_0] : memref<4x4xbf16, #tpu.memory_space<vmem>>, vector<4x4xbf16>
    %c0_1 = arith.constant 0 : index
    %c0_2 = arith.constant 0 : index
    %1 = vector.load %arg3[%c0_1, %c0_2] : memref<4x1xf32, #tpu.memory_space<vmem>>, vector<4x1xf32>
    %c0_3 = arith.constant 0 : index
    %c0_4 = arith.constant 0 : index
    %2 = vector.load %arg4[%c0_3, %c0_4] : memref<4x1xf32, #tpu.memory_space<vmem>>, vector<4x1xf32>
    %c0_5 = arith.constant 0 : index
    %c0_6 = arith.constant 0 : index
    %c0_7 = arith.constant 0 : index
    %3 = vector.load %arg5[%c0_5, %c0_6, %c0_7] : memref<25x4x1xf32, #tpu.memory_space<vmem>>, vector<1x4x1xf32>
    %4 = vector.shape_cast %3 : vector<1x4x1xf32> to vector<4x1xf32>
    %c1 = arith.constant 1 : index
    %c0_8 = arith.constant 0 : index
    %c0_9 = arith.constant 0 : index
    %5 = vector.load %arg5[%c1, %c0_8, %c0_9] : memref<25x4x1xf32, #tpu.memory_space<vmem>>, vector<1x4x1xf32>
    %6 = vector.shape_cast %5 : vector<1x4x1xf32> to vector<4x1xf32>
    %c2 = arith.constant 2 : index
    %c0_10 = arith.constant 0 : index
    %c0_11 = arith.constant 0 : index
    %7 = vector.load %arg5[%c2, %c0_10, %c0_11] : memref<25x4x1xf32, #tpu.memory_space<vmem>>, vector<1x4x1xf32>
    %8 = vector.shape_cast %7 : vector<1x4x1xf32> to vector<4x1xf32>
    %c3 = arith.constant 3 : index
    %c0_12 = arith.constant 0 : index
    %c0_13 = arith.constant 0 : index
    %9 = vector.load %arg5[%c3, %c0_12, %c0_13] : memref<25x4x1xf32, #tpu.memory_space<vmem>>, vector<1x4x1xf32>
    %10 = vector.shape_cast %9 : vector<1x4x1xf32> to vector<4x1xf32>
    %c4 = arith.constant 4 : index
    %c0_14 = arith.constant 0 : index
    %c0_15 = arith.constant 0 : index
    %11 = vector.load %arg5[%c4, %c0_14, %c0_15] : memref<25x4x1xf32, #tpu.memory_space<vmem>>, vector<1x4x1xf32>
    %12 = vector.shape_cast %11 : vector<1x4x1xf32> to vector<4x1xf32>
    %c5 = arith.constant 5 : index
    %c0_16 = arith.constant 0 : index
    %c0_17 = arith.constant 0 : index
    %13 = vector.load %arg5[%c5, %c0_16, %c0_17] : memref<25x4x1xf32, #tpu.memory_space<vmem>>, vector<1x4x1xf32>
    %14 = vector.shape_cast %13 : vector<1x4x1xf32> to vector<4x1xf32>
    %c6 = arith.constant 6 : index
    %c0_18 = arith.constant 0 : index
    %c0_19 = arith.constant 0 : index
    %15 = vector.load %arg5[%c6, %c0_18, %c0_19] : memref<25x4x1xf32, #tpu.memory_space<vmem>>, vector<1x4x1xf32>
    %16 = vector.shape_cast %15 : vector<1x4x1xf32> to vector<4x1xf32>
    %c7 = arith.constant 7 : index
    %c0_20 = arith.constant 0 : index
    %c0_21 = arith.constant 0 : index
    %17 = vector.load %arg5[%c7, %c0_20, %c0_21] : memref<25x4x1xf32, #tpu.memory_space<vmem>>, vector<1x4x1xf32>
    %18 = vector.shape_cast %17 : vector<1x4x1xf32> to vector<4x1xf32>
    %c8 = arith.constant 8 : index
    %c0_22 = arith.constant 0 : index
    %c0_23 = arith.constant 0 : index
    %19 = vector.load %arg5[%c8, %c0_22, %c0_23] : memref<25x4x1xf32, #tpu.memory_space<vmem>>, vector<1x4x1xf32>
    %20 = vector.shape_cast %19 : vector<1x4x1xf32> to vector<4x1xf32>
    %c9 = arith.constant 9 : index
    %c0_24 = arith.constant 0 : index
    %c0_25 = arith.constant 0 : index
    %21 = vector.load %arg5[%c9, %c0_24, %c0_25] : memref<25x4x1xf32, #tpu.memory_space<vmem>>, vector<1x4x1xf32>
    %22 = vector.shape_cast %21 : vector<1x4x1xf32> to vector<4x1xf32>
    %c10 = arith.constant 10 : index
    %c0_26 = arith.constant 0 : index
    %c0_27 = arith.constant 0 : index
    %23 = vector.load %arg5[%c10, %c0_26, %c0_27] : memref<25x4x1xf32, #tpu.memory_space<vmem>>, vector<1x4x1xf32>
    %24 = vector.shape_cast %23 : vector<1x4x1xf32> to vector<4x1xf32>
    %c11 = arith.constant 11 : index
    %c0_28 = arith.constant 0 : index
    %c0_29 = arith.constant 0 : index
    %25 = vector.load %arg5[%c11, %c0_28, %c0_29] : memref<25x4x1xf32, #tpu.memory_space<vmem>>, vector<1x4x1xf32>
    %26 = vector.shape_cast %25 : vector<1x4x1xf32> to vector<4x1xf32>
    %c12 = arith.constant 12 : index
    %c0_30 = arith.constant 0 : index
    %c0_31 = arith.constant 0 : index
    %27 = vector.load %arg5[%c12, %c0_30, %c0_31] : memref<25x4x1xf32, #tpu.memory_space<vmem>>, vector<1x4x1xf32>
    %28 = vector.shape_cast %27 : vector<1x4x1xf32> to vector<4x1xf32>
    %c13 = arith.constant 13 : index
    %c0_32 = arith.constant 0 : index
    %c0_33 = arith.constant 0 : index
    %29 = vector.load %arg5[%c13, %c0_32, %c0_33] : memref<25x4x1xf32, #tpu.memory_space<vmem>>, vector<1x4x1xf32>
    %30 = vector.shape_cast %29 : vector<1x4x1xf32> to vector<4x1xf32>
    %c14 = arith.constant 14 : index
    %c0_34 = arith.constant 0 : index
    %c0_35 = arith.constant 0 : index
    %31 = vector.load %arg5[%c14, %c0_34, %c0_35] : memref<25x4x1xf32, #tpu.memory_space<vmem>>, vector<1x4x1xf32>
    %32 = vector.shape_cast %31 : vector<1x4x1xf32> to vector<4x1xf32>
    %c15 = arith.constant 15 : index
    %c0_36 = arith.constant 0 : index
    %c0_37 = arith.constant 0 : index
    %33 = vector.load %arg5[%c15, %c0_36, %c0_37] : memref<25x4x1xf32, #tpu.memory_space<vmem>>, vector<1x4x1xf32>
    %34 = vector.shape_cast %33 : vector<1x4x1xf32> to vector<4x1xf32>
    %c16 = arith.constant 16 : index
    %c0_38 = arith.constant 0 : index
    %c0_39 = arith.constant 0 : index
    %35 = vector.load %arg5[%c16, %c0_38, %c0_39] : memref<25x4x1xf32, #tpu.memory_space<vmem>>, vector<1x4x1xf32>
    %36 = vector.shape_cast %35 : vector<1x4x1xf32> to vector<4x1xf32>
    %c17 = arith.constant 17 : index
    %c0_40 = arith.constant 0 : index
    %c0_41 = arith.constant 0 : index
    %37 = vector.load %arg5[%c17, %c0_40, %c0_41] : memref<25x4x1xf32, #tpu.memory_space<vmem>>, vector<1x4x1xf32>
    %38 = vector.shape_cast %37 : vector<1x4x1xf32> to vector<4x1xf32>
    %c18 = arith.constant 18 : index
    %c0_42 = arith.constant 0 : index
    %c0_43 = arith.constant 0 : index
    %39 = vector.load %arg5[%c18, %c0_42, %c0_43] : memref<25x4x1xf32, #tpu.memory_space<vmem>>, vector<1x4x1xf32>
    %40 = vector.shape_cast %39 : vector<1x4x1xf32> to vector<4x1xf32>
    %c19 = arith.constant 19 : index
    %c0_44 = arith.constant 0 : index
    %c0_45 = arith.constant 0 : index
    %41 = vector.load %arg5[%c19, %c0_44, %c0_45] : memref<25x4x1xf32, #tpu.memory_space<vmem>>, vector<1x4x1xf32>
    %42 = vector.shape_cast %41 : vector<1x4x1xf32> to vector<4x1xf32>
    %c20 = arith.constant 20 : index
    %c0_46 = arith.constant 0 : index
    %c0_47 = arith.constant 0 : index
    %43 = vector.load %arg5[%c20, %c0_46, %c0_47] : memref<25x4x1xf32, #tpu.memory_space<vmem>>, vector<1x4x1xf32>
    %44 = vector.shape_cast %43 : vector<1x4x1xf32> to vector<4x1xf32>
    %c21 = arith.constant 21 : index
    %c0_48 = arith.constant 0 : index
    %c0_49 = arith.constant 0 : index
    %45 = vector.load %arg5[%c21, %c0_48, %c0_49] : memref<25x4x1xf32, #tpu.memory_space<vmem>>, vector<1x4x1xf32>
    %46 = vector.shape_cast %45 : vector<1x4x1xf32> to vector<4x1xf32>
    %c22 = arith.constant 22 : index
    %c0_50 = arith.constant 0 : index
    %c0_51 = arith.constant 0 : index
    %47 = vector.load %arg5[%c22, %c0_50, %c0_51] : memref<25x4x1xf32, #tpu.memory_space<vmem>>, vector<1x4x1xf32>
    %48 = vector.shape_cast %47 : vector<1x4x1xf32> to vector<4x1xf32>
    %c23 = arith.constant 23 : index
    %c0_52 = arith.constant 0 : index
    %c0_53 = arith.constant 0 : index
    %49 = vector.load %arg5[%c23, %c0_52, %c0_53] : memref<25x4x1xf32, #tpu.memory_space<vmem>>, vector<1x4x1xf32>
    %50 = vector.shape_cast %49 : vector<1x4x1xf32> to vector<4x1xf32>
    %c24 = arith.constant 24 : index
    %c0_54 = arith.constant 0 : index
    %c0_55 = arith.constant 0 : index
    %51 = vector.load %arg5[%c24, %c0_54, %c0_55] : memref<25x4x1xf32, #tpu.memory_space<vmem>>, vector<1x4x1xf32>
    %52 = vector.shape_cast %51 : vector<1x4x1xf32> to vector<4x1xf32>
    %c0_56 = arith.constant 0 : index
    %c0_57 = arith.constant 0 : index
    %53 = vector.load %arg6[%c0_56, %c0_57] : memref<4x1xf32, #tpu.memory_space<vmem>>, vector<4x1xf32>
    %c0_58 = arith.constant 0 : index
    %c0_59 = arith.constant 0 : index
    %54 = vector.load %arg7[%c0_58, %c0_59] : memref<4x1xf32, #tpu.memory_space<vmem>>, vector<4x1xf32>
    %c0_60 = arith.constant 0 : index
    %c0_61 = arith.constant 0 : index
    %55 = vector.load %arg8[%c0_60, %c0_61] : memref<8x8xbf16, #tpu.memory_space<vmem>>, vector<8x8xbf16>
    %c0_62 = arith.constant 0 : index
    %c0_63 = arith.constant 0 : index
    %56 = vector.load %arg9[%c0_62, %c0_63] : memref<8x1xf32, #tpu.memory_space<vmem>>, vector<8x1xf32>
    %c0_64 = arith.constant 0 : index
    %c0_65 = arith.constant 0 : index
    %57 = vector.load %arg10[%c0_64, %c0_65] : memref<8x1xf32, #tpu.memory_space<vmem>>, vector<8x1xf32>
    %cst = arith.constant 0.000000e+00 : f32
    %58 = vector.broadcast %cst : f32 to vector<4x128xf32>
    %c0_66 = arith.constant 0 : index
    %c0_67 = arith.constant 0 : index
    %59 = vector.load %arg12[%c0_66, %c0_67] : memref<4x512xf32, #tpu.memory_space<vmem>>, vector<4x128xf32>
    tpu.vector_store %arg12[%c0_66, %c0_67], %58 {strides = array<i32>} : memref<4x512xf32, #tpu.memory_space<vmem>>, vector<4x128xf32>,
    %cst_68 = arith.constant 0.000000e+00 : f32
    %60 = vector.broadcast %cst_68 : f32 to vector<4x128xf32>
    %c0_69 = arith.constant 0 : index
    %c384 = arith.constant 384 : index
    %61 = vector.load %arg12[%c0_69, %c384] : memref<4x512xf32, #tpu.memory_space<vmem>>, vector<4x128xf32>
    tpu.vector_store %arg12[%c0_69, %c384], %60 {strides = array<i32>} : memref<4x512xf32, #tpu.memory_space<vmem>>, vector<4x128xf32>,
    %c0_70 = arith.constant 0 : index
    %c0_71 = arith.constant 0 : index
    %c0_72 = arith.constant 0 : index
    %62 = vector.load %arg1[%c0_70, %c0_71, %c0_72] : memref<1x4x256xbf16, #tpu.memory_space<vmem>>, vector<1x4x256xbf16>
    %63 = vector.shape_cast %62 : vector<1x4x256xbf16> to vector<4x256xbf16>
    %cst_73 = arith.constant dense<0.000000e+00> : vector<4x256xf32>
    %64 = tpu.matmul %0, %63, %cst_73 {dimension_numbers = #tpu.dot_dimension_numbers<[1], [0], [0], [1], [0, 0, 1, 1], [], []>} : vector<4x4xbf16>, vector<4x256xbf16>, vector<4x256xf32> -> vector<4x256xf32>
    %65 = vector.broadcast %1 : vector<4x1xf32> to vector<4x256xf32>
    %66 = arith.mulf %64, %65 : vector<4x256xf32>
    %67 = vector.broadcast %2 : vector<4x1xf32> to vector<4x256xf32>
    %68 = arith.addf %66, %67 : vector<4x256xf32>
    %cst_74 = arith.constant 0.000000e+00 : f32
    %69 = vector.broadcast %cst_74 : f32 to vector<4x256xf32>
    %70 = arith.subf %69, %68 : vector<4x256xf32>
    %71 = math.exp %70 : vector<4x256xf32>
    %cst_75 = arith.constant 1.000000e+00 : f32
    %72 = vector.broadcast %cst_75 : f32 to vector<4x256xf32>
    %73 = arith.addf %72, %71 : vector<4x256xf32>
    %74 = arith.divf %68, %73 : vector<4x256xf32>
    %c0_76 = arith.constant 0 : index
    %c128 = arith.constant 128 : index
    %75 = vector.load %arg12[%c0_76, %c128] : memref<4x512xf32, #tpu.memory_space<vmem>>, vector<4x256xf32>
    tpu.vector_store %arg12[%c0_76, %c128], %74 {strides = array<i32>} : memref<4x512xf32, #tpu.memory_space<vmem>>, vector<4x256xf32>,
    %76 = tpu.iota {dimensions = array<i32: 1>} : vector<1x256xi32>
    %c16_i32 = arith.constant 16 : i32
    %c0_i32 = arith.constant 0 : i32
    %77 = arith.cmpi eq, %c16_i32, %c0_i32 : i32
    %c1_i32 = arith.constant 1 : i32
    %78 = arith.select %77, %c1_i32, %c16_i32 : i32
    %79 = vector.broadcast %78 : i32 to vector<1x256xi32>
    %80 = arith.remsi %76, %79 : vector<1x256xi32>
    %c0_i32_77 = arith.constant 0 : i32
    %81 = vector.broadcast %c0_i32_77 : i32 to vector<1x256xi32>
    %82 = arith.cmpi ne, %80, %81 : vector<1x256xi32>
    %c0_i32_78 = arith.constant 0 : i32
    %83 = vector.broadcast %c0_i32_78 : i32 to vector<1x256xi32>
    %84 = arith.cmpi slt, %80, %83 : vector<1x256xi32>
    %c0_i32_79 = arith.constant 0 : i32
    %85 = arith.cmpi slt, %78, %c0_i32_79 : i32
    %86 = vector.broadcast %85 : i1 to vector<1x256xi1>
    %87 = vector.broadcast %86 : vector<1x256xi1> to vector<1x256xi1>
    %88 = arith.xori %84, %87 : vector<1x256xi1>
    %89 = arith.andi %88, %82 : vector<1x256xi1>
    %90 = vector.broadcast %78 : i32 to vector<1x256xi32>
    %91 = arith.addi %80, %90 : vector<1x256xi32>
    %92 = arith.select %89, %91, %80 : vector<1x256xi1>, vector<1x256xi32>
    %c-2_i32 = arith.constant -2 : i32
    %93 = vector.broadcast %c-2_i32 : i32 to vector<1x256xi32>
    %94 = arith.addi %92, %93 : vector<1x256xi32>
    %c0_i32_80 = arith.constant 0 : i32
    %95 = vector.broadcast %c0_i32_80 : i32 to vector<1x256xi32>
    %96 = arith.cmpi sge, %94, %95 : vector<1x256xi32>
    %c-2_i32_81 = arith.constant -2 : i32
    %97 = vector.broadcast %c-2_i32_81 : i32 to vector<1x256xi32>
    %98 = arith.addi %92, %97 : vector<1x256xi32>
    %c16_i32_82 = arith.constant 16 : i32
    %99 = vector.broadcast %c16_i32_82 : i32 to vector<1x256xi32>
    %100 = arith.cmpi slt, %98, %99 : vector<1x256xi32>
    %101 = arith.andi %96, %100 : vector<1x256xi1>
    %c-1_i32 = arith.constant -1 : i32
    %102 = vector.broadcast %c-1_i32 : i32 to vector<1x256xi32>
    %103 = arith.addi %92, %102 : vector<1x256xi32>
    %c0_i32_83 = arith.constant 0 : i32
    %104 = vector.broadcast %c0_i32_83 : i32 to vector<1x256xi32>
    %105 = arith.cmpi sge, %103, %104 : vector<1x256xi32>
    %c-1_i32_84 = arith.constant -1 : i32
    %106 = vector.broadcast %c-1_i32_84 : i32 to vector<1x256xi32>
    %107 = arith.addi %92, %106 : vector<1x256xi32>
    %c16_i32_85 = arith.constant 16 : i32
    %108 = vector.broadcast %c16_i32_85 : i32 to vector<1x256xi32>
    %109 = arith.cmpi slt, %107, %108 : vector<1x256xi32>
    %110 = arith.andi %105, %109 : vector<1x256xi1>
    %c1_i32_86 = arith.constant 1 : i32
    %111 = vector.broadcast %c1_i32_86 : i32 to vector<1x256xi32>
    %112 = arith.addi %92, %111 : vector<1x256xi32>
    %c0_i32_87 = arith.constant 0 : i32
    %113 = vector.broadcast %c0_i32_87 : i32 to vector<1x256xi32>
    %114 = arith.cmpi sge, %112, %113 : vector<1x256xi32>
    %c1_i32_88 = arith.constant 1 : i32
    %115 = vector.broadcast %c1_i32_88 : i32 to vector<1x256xi32>
    %116 = arith.addi %92, %115 : vector<1x256xi32>
    %c16_i32_89 = arith.constant 16 : i32
    %117 = vector.broadcast %c16_i32_89 : i32 to vector<1x256xi32>
    %118 = arith.cmpi slt, %116, %117 : vector<1x256xi32>
    %119 = arith.andi %114, %118 : vector<1x256xi1>
    %c2_i32 = arith.constant 2 : i32
    %120 = vector.broadcast %c2_i32 : i32 to vector<1x256xi32>
    %121 = arith.addi %92, %120 : vector<1x256xi32>
    %c0_i32_90 = arith.constant 0 : i32
    %122 = vector.broadcast %c0_i32_90 : i32 to vector<1x256xi32>
    %123 = arith.cmpi sge, %121, %122 : vector<1x256xi32>
    %c2_i32_91 = arith.constant 2 : i32
    %124 = vector.broadcast %c2_i32_91 : i32 to vector<1x256xi32>
    %125 = arith.addi %92, %124 : vector<1x256xi32>
    %c16_i32_92 = arith.constant 16 : i32
    %126 = vector.broadcast %c16_i32_92 : i32 to vector<1x256xi32>
    %127 = arith.cmpi slt, %125, %126 : vector<1x256xi32>
    %128 = arith.andi %123, %127 : vector<1x256xi1>
    %cst_93 = arith.constant 0.000000e+00 : f32
    %129 = vector.broadcast %cst_93 : f32 to vector<4x256xf32>
    %cst_94 = arith.constant 0.000000e+00 : f32
    %130 = vector.broadcast %cst_94 : f32 to vector<4x256xf32>
    %c0_95 = arith.constant 0 : index
    %c94 = arith.constant 94 : index
    %131 = vector.load %arg12[%c0_95, %c94] : memref<4x512xf32, #tpu.memory_space<vmem>>, vector<4x256xf32>
    %132 = vector.broadcast %4 : vector<4x1xf32> to vector<4x256xf32>
    %133 = arith.mulf %131, %132 : vector<4x256xf32>
    %134 = arith.addf %130, %133 : vector<4x256xf32>
    %c0_96 = arith.constant 0 : index
    %c110 = arith.constant 110 : index
    %135 = vector.load %arg12[%c0_96, %c110] : memref<4x512xf32, #tpu.memory_space<vmem>>, vector<4x256xf32>
    %136 = vector.broadcast %14 : vector<4x1xf32> to vector<4x256xf32>
    %137 = arith.mulf %135, %136 : vector<4x256xf32>
    %138 = arith.addf %134, %137 : vector<4x256xf32>
    %c0_97 = arith.constant 0 : index
    %c126 = arith.constant 126 : index
    %139 = vector.load %arg12[%c0_97, %c126] : memref<4x512xf32, #tpu.memory_space<vmem>>, vector<4x256xf32>
    %140 = vector.broadcast %24 : vector<4x1xf32> to vector<4x256xf32>
    %141 = arith.mulf %139, %140 : vector<4x256xf32>
    %142 = arith.addf %138, %141 : vector<4x256xf32>
    %c0_98 = arith.constant 0 : index
    %c142 = arith.constant 142 : index
    %143 = vector.load %arg12[%c0_98, %c142] : memref<4x512xf32, #tpu.memory_space<vmem>>, vector<4x256xf32>
    %144 = vector.broadcast %34 : vector<4x1xf32> to vector<4x256xf32>
    %145 = arith.mulf %143, %144 : vector<4x256xf32>
    %146 = arith.addf %142, %145 : vector<4x256xf32>
    %c0_99 = arith.constant 0 : index
    %c158 = arith.constant 158 : index
    %147 = vector.load %arg12[%c0_99, %c158] : memref<4x512xf32, #tpu.memory_space<vmem>>, vector<4x256xf32>
    %148 = vector.broadcast %44 : vector<4x1xf32> to vector<4x256xf32>
    %149 = arith.mulf %147, %148 : vector<4x256xf32>
    %150 = arith.addf %146, %149 : vector<4x256xf32>
    %cst_100 = arith.constant 0.000000e+00 : f32
    %151 = vector.shape_cast %101 : vector<1x256xi1> to vector<1x256xi1>
    %152 = vector.broadcast %151 : vector<1x256xi1> to vector<4x256xi1>
    %153 = vector.broadcast %cst_100 : f32 to vector<4x256xf32>
    %154 = arith.select %152, %150, %153 : vector<4x256xi1>, vector<4x256xf32>
    %155 = arith.addf %129, %154 : vector<4x256xf32>
    %cst_101 = arith.constant 0.000000e+00 : f32
    %156 = vector.broadcast %cst_101 : f32 to vector<4x256xf32>
    %c0_102 = arith.constant 0 : index
    %c95 = arith.constant 95 : index
    %157 = vector.load %arg12[%c0_102, %c95] : memref<4x512xf32, #tpu.memory_space<vmem>>, vector<4x256xf32>
    %158 = vector.broadcast %6 : vector<4x1xf32> to vector<4x256xf32>
    %159 = arith.mulf %157, %158 : vector<4x256xf32>
    %160 = arith.addf %156, %159 : vector<4x256xf32>
    %c0_103 = arith.constant 0 : index
    %c111 = arith.constant 111 : index
    %161 = vector.load %arg12[%c0_103, %c111] : memref<4x512xf32, #tpu.memory_space<vmem>>, vector<4x256xf32>
    %162 = vector.broadcast %16 : vector<4x1xf32> to vector<4x256xf32>
    %163 = arith.mulf %161, %162 : vector<4x256xf32>
    %164 = arith.addf %160, %163 : vector<4x256xf32>
    %c0_104 = arith.constant 0 : index
    %c127 = arith.constant 127 : index
    %165 = vector.load %arg12[%c0_104, %c127] : memref<4x512xf32, #tpu.memory_space<vmem>>, vector<4x256xf32>
    %166 = vector.broadcast %26 : vector<4x1xf32> to vector<4x256xf32>
    %167 = arith.mulf %165, %166 : vector<4x256xf32>
    %168 = arith.addf %164, %167 : vector<4x256xf32>
    %c0_105 = arith.constant 0 : index
    %c143 = arith.constant 143 : index
    %169 = vector.load %arg12[%c0_105, %c143] : memref<4x512xf32, #tpu.memory_space<vmem>>, vector<4x256xf32>
    %170 = vector.broadcast %36 : vector<4x1xf32> to vector<4x256xf32>
    %171 = arith.mulf %169, %170 : vector<4x256xf32>
    %172 = arith.addf %168, %171 : vector<4x256xf32>
    %c0_106 = arith.constant 0 : index
    %c159 = arith.constant 159 : index
    %173 = vector.load %arg12[%c0_106, %c159] : memref<4x512xf32, #tpu.memory_space<vmem>>, vector<4x256xf32>
    %174 = vector.broadcast %46 : vector<4x1xf32> to vector<4x256xf32>
    %175 = arith.mulf %173, %174 : vector<4x256xf32>
    %176 = arith.addf %172, %175 : vector<4x256xf32>
    %cst_107 = arith.constant 0.000000e+00 : f32
    %177 = vector.shape_cast %110 : vector<1x256xi1> to vector<1x256xi1>
    %178 = vector.broadcast %177 : vector<1x256xi1> to vector<4x256xi1>
    %179 = vector.broadcast %cst_107 : f32 to vector<4x256xf32>
    %180 = arith.select %178, %176, %179 : vector<4x256xi1>, vector<4x256xf32>
    %181 = arith.addf %155, %180 : vector<4x256xf32>
    %cst_108 = arith.constant 0.000000e+00 : f32
    %182 = vector.broadcast %cst_108 : f32 to vector<4x256xf32>
    %c0_109 = arith.constant 0 : index
    %c96 = arith.constant 96 : index
    %183 = vector.load %arg12[%c0_109, %c96] : memref<4x512xf32, #tpu.memory_space<vmem>>, vector<4x256xf32>
    %184 = vector.broadcast %8 : vector<4x1xf32> to vector<4x256xf32>
    %185 = arith.mulf %183, %184 : vector<4x256xf32>
    %186 = arith.addf %182, %185 : vector<4x256xf32>
    %c0_110 = arith.constant 0 : index
    %c112 = arith.constant 112 : index
    %187 = vector.load %arg12[%c0_110, %c112] : memref<4x512xf32, #tpu.memory_space<vmem>>, vector<4x256xf32>
    %188 = vector.broadcast %18 : vector<4x1xf32> to vector<4x256xf32>
    %189 = arith.mulf %187, %188 : vector<4x256xf32>
    %190 = arith.addf %186, %189 : vector<4x256xf32>
    %c0_111 = arith.constant 0 : index
    %c128_112 = arith.constant 128 : index
    %191 = vector.load %arg12[%c0_111, %c128_112] : memref<4x512xf32, #tpu.memory_space<vmem>>, vector<4x256xf32>
    %192 = vector.broadcast %28 : vector<4x1xf32> to vector<4x256xf32>
    %193 = arith.mulf %191, %192 : vector<4x256xf32>
    %194 = arith.addf %190, %193 : vector<4x256xf32>
    %c0_113 = arith.constant 0 : index
    %c144 = arith.constant 144 : index
    %195 = vector.load %arg12[%c0_113, %c144] : memref<4x512xf32, #tpu.memory_space<vmem>>, vector<4x256xf32>
    %196 = vector.broadcast %38 : vector<4x1xf32> to vector<4x256xf32>
    %197 = arith.mulf %195, %196 : vector<4x256xf32>
    %198 = arith.addf %194, %197 : vector<4x256xf32>
    %c0_114 = arith.constant 0 : index
    %c160 = arith.constant 160 : index
    %199 = vector.load %arg12[%c0_114, %c160] : memref<4x512xf32, #tpu.memory_space<vmem>>, vector<4x256xf32>
    %200 = vector.broadcast %48 : vector<4x1xf32> to vector<4x256xf32>
    %201 = arith.mulf %199, %200 : vector<4x256xf32>
    %202 = arith.addf %198, %201 : vector<4x256xf32>
    %203 = arith.addf %181, %202 : vector<4x256xf32>
    %cst_115 = arith.constant 0.000000e+00 : f32
    %204 = vector.broadcast %cst_115 : f32 to vector<4x256xf32>
    %c0_116 = arith.constant 0 : index
    %c97 = arith.constant 97 : index
    %205 = vector.load %arg12[%c0_116, %c97] : memref<4x512xf32, #tpu.memory_space<vmem>>, vector<4x256xf32>
    %206 = vector.broadcast %10 : vector<4x1xf32> to vector<4x256xf32>
    %207 = arith.mulf %205, %206 : vector<4x256xf32>
    %208 = arith.addf %204, %207 : vector<4x256xf32>
    %c0_117 = arith.constant 0 : index
    %c113 = arith.constant 113 : index
    %209 = vector.load %arg12[%c0_117, %c113] : memref<4x512xf32, #tpu.memory_space<vmem>>, vector<4x256xf32>
    %210 = vector.broadcast %20 : vector<4x1xf32> to vector<4x256xf32>
    %211 = arith.mulf %209, %210 : vector<4x256xf32>
    %212 = arith.addf %208, %211 : vector<4x256xf32>
    %c0_118 = arith.constant 0 : index
    %c129 = arith.constant 129 : index
    %213 = vector.load %arg12[%c0_118, %c129] : memref<4x512xf32, #tpu.memory_space<vmem>>, vector<4x256xf32>
    %214 = vector.broadcast %30 : vector<4x1xf32> to vector<4x256xf32>
    %215 = arith.mulf %213, %214 : vector<4x256xf32>
    %216 = arith.addf %212, %215 : vector<4x256xf32>
    %c0_119 = arith.constant 0 : index
    %c145 = arith.constant 145 : index
    %217 = vector.load %arg12[%c0_119, %c145] : memref<4x512xf32, #tpu.memory_space<vmem>>, vector<4x256xf32>
    %218 = vector.broadcast %40 : vector<4x1xf32> to vector<4x256xf32>
    %219 = arith.mulf %217, %218 : vector<4x256xf32>
    %220 = arith.addf %216, %219 : vector<4x256xf32>
    %c0_120 = arith.constant 0 : index
    %c161 = arith.constant 161 : index
    %221 = vector.load %arg12[%c0_120, %c161] : memref<4x512xf32, #tpu.memory_space<vmem>>, vector<4x256xf32>
    %222 = vector.broadcast %50 : vector<4x1xf32> to vector<4x256xf32>
    %223 = arith.mulf %221, %222 : vector<4x256xf32>
    %224 = arith.addf %220, %223 : vector<4x256xf32>
    %cst_121 = arith.constant 0.000000e+00 : f32
    %225 = vector.shape_cast %119 : vector<1x256xi1> to vector<1x256xi1>
    %226 = vector.broadcast %225 : vector<1x256xi1> to vector<4x256xi1>
    %227 = vector.broadcast %cst_121 : f32 to vector<4x256xf32>
    %228 = arith.select %226, %224, %227 : vector<4x256xi1>, vector<4x256xf32>
    %229 = arith.addf %203, %228 : vector<4x256xf32>
    %cst_122 = arith.constant 0.000000e+00 : f32
    %230 = vector.broadcast %cst_122 : f32 to vector<4x256xf32>
    %c0_123 = arith.constant 0 : index
    %c98 = arith.constant 98 : index
    %231 = vector.load %arg12[%c0_123, %c98] : memref<4x512xf32, #tpu.memory_space<vmem>>, vector<4x256xf32>
    %232 = vector.broadcast %12 : vector<4x1xf32> to vector<4x256xf32>
    %233 = arith.mulf %231, %232 : vector<4x256xf32>
    %234 = arith.addf %230, %233 : vector<4x256xf32>
    %c0_124 = arith.constant 0 : index
    %c114 = arith.constant 114 : index
    %235 = vector.load %arg12[%c0_124, %c114] : memref<4x512xf32, #tpu.memory_space<vmem>>, vector<4x256xf32>
    %236 = vector.broadcast %22 : vector<4x1xf32> to vector<4x256xf32>
    %237 = arith.mulf %235, %236 : vector<4x256xf32>
    %238 = arith.addf %234, %237 : vector<4x256xf32>
    %c0_125 = arith.constant 0 : index
    %c130 = arith.constant 130 : index
    %239 = vector.load %arg12[%c0_125, %c130] : memref<4x512xf32, #tpu.memory_space<vmem>>, vector<4x256xf32>
    %240 = vector.broadcast %32 : vector<4x1xf32> to vector<4x256xf32>
    %241 = arith.mulf %239, %240 : vector<4x256xf32>
    %242 = arith.addf %238, %241 : vector<4x256xf32>
    %c0_126 = arith.constant 0 : index
    %c146 = arith.constant 146 : index
    %243 = vector.load %arg12[%c0_126, %c146] : memref<4x512xf32, #tpu.memory_space<vmem>>, vector<4x256xf32>
    %244 = vector.broadcast %42 : vector<4x1xf32> to vector<4x256xf32>
    %245 = arith.mulf %243, %244 : vector<4x256xf32>
    %246 = arith.addf %242, %245 : vector<4x256xf32>
    %c0_127 = arith.constant 0 : index
    %c162 = arith.constant 162 : index
    %247 = vector.load %arg12[%c0_127, %c162] : memref<4x512xf32, #tpu.memory_space<vmem>>, vector<4x256xf32>
    %248 = vector.broadcast %52 : vector<4x1xf32> to vector<4x256xf32>
    %249 = arith.mulf %247, %248 : vector<4x256xf32>
    %250 = arith.addf %246, %249 : vector<4x256xf32>
    %cst_128 = arith.constant 0.000000e+00 : f32
    %251 = vector.shape_cast %128 : vector<1x256xi1> to vector<1x256xi1>
    %252 = vector.broadcast %251 : vector<1x256xi1> to vector<4x256xi1>
    %253 = vector.broadcast %cst_128 : f32 to vector<4x256xf32>
    %254 = arith.select %252, %250, %253 : vector<4x256xi1>, vector<4x256xf32>
    %255 = arith.addf %229, %254 : vector<4x256xf32>
    %256 = vector.broadcast %53 : vector<4x1xf32> to vector<4x256xf32>
    %257 = arith.mulf %255, %256 : vector<4x256xf32>
    %258 = vector.broadcast %54 : vector<4x1xf32> to vector<4x256xf32>
    %259 = arith.addf %257, %258 : vector<4x256xf32>
    %cst_129 = arith.constant 0.000000e+00 : f32
    %260 = vector.broadcast %cst_129 : f32 to vector<4x256xf32>
    %261 = arith.subf %260, %259 : vector<4x256xf32>
    %262 = math.exp %261 : vector<4x256xf32>
    %cst_130 = arith.constant 1.000000e+00 : f32
    %263 = vector.broadcast %cst_130 : f32 to vector<4x256xf32>
    %264 = arith.addf %263, %262 : vector<4x256xf32>
    %265 = arith.divf %259, %264 : vector<4x256xf32>
    %c0_131 = arith.constant 0 : index
    %c128_132 = arith.constant 128 : index
    %266 = vector.load %arg12[%c0_131, %c128_132] : memref<4x512xf32, #tpu.memory_space<vmem>>, vector<4x256xf32>
    %267 = vector.extract_strided_slice %55 {offsets = [0, 0], sizes = [8, 4], strides = [1, 1]} : vector<8x8xbf16> to vector<8x4xbf16>
    %268 = arith.truncf %266 : vector<4x256xf32> to vector<4x256xbf16>
    %cst_133 = arith.constant dense<0.000000e+00> : vector<8x256xf32>
    %269 = tpu.matmul %267, %268, %cst_133 {dimension_numbers = #tpu.dot_dimension_numbers<[1], [0], [0], [1], [0, 0, 1, 1], [], []>} : vector<8x4xbf16>, vector<4x256xbf16>, vector<8x256xf32> -> vector<8x256xf32>
    %270 = vector.extract_strided_slice %55 {offsets = [0, 4], sizes = [8, 4], strides = [1, 1]} : vector<8x8xbf16> to vector<8x4xbf16>
    %271 = arith.truncf %265 : vector<4x256xf32> to vector<4x256xbf16>
    %cst_134 = arith.constant dense<0.000000e+00> : vector<8x256xf32>
    %272 = tpu.matmul %270, %271, %cst_134 {dimension_numbers = #tpu.dot_dimension_numbers<[1], [0], [0], [1], [0, 0, 1, 1], [], []>} : vector<8x4xbf16>, vector<4x256xbf16>, vector<8x256xf32> -> vector<8x256xf32>
    %273 = arith.addf %269, %272 : vector<8x256xf32>
    %274 = vector.broadcast %56 : vector<8x1xf32> to vector<8x256xf32>
    %275 = arith.mulf %273, %274 : vector<8x256xf32>
    %276 = vector.broadcast %57 : vector<8x1xf32> to vector<8x256xf32>
    %277 = arith.addf %275, %276 : vector<8x256xf32>
    %cst_135 = arith.constant 0.000000e+00 : f32
    %278 = vector.broadcast %cst_135 : f32 to vector<8x256xf32>
    %279 = arith.subf %278, %277 : vector<8x256xf32>
    %280 = math.exp %279 : vector<8x256xf32>
    %cst_136 = arith.constant 1.000000e+00 : f32
    %281 = vector.broadcast %cst_136 : f32 to vector<8x256xf32>
    %282 = arith.addf %281, %280 : vector<8x256xf32>
    %283 = arith.divf %277, %282 : vector<8x256xf32>
    %284 = arith.truncf %283 : vector<8x256xf32> to vector<8x256xbf16>
    %c0_137 = arith.constant 0 : index
    %c0_138 = arith.constant 0 : index
    %c0_139 = arith.constant 0 : index
    %285 = vector.load %arg11[%c0_137, %c0_138, %c0_139] : memref<1x8x256xbf16, #tpu.memory_space<vmem>>, vector<1x8x256xbf16>
    %286 = vector.shape_cast %285 : vector<1x8x256xbf16> to vector<8x256xbf16>
    %287 = vector.shape_cast %284 : vector<8x256xbf16> to vector<1x8x256xbf16>
    tpu.vector_store %arg11[%c0_137, %c0_138, %c0_139], %287 {strides = array<i32>} : memref<1x8x256xbf16, #tpu.memory_space<vmem>>, vector<1x8x256xbf16>,
    return
  }
  func.func @transform_0(%arg0: i32) -> (i32, i32, i32) {
    %c0_i32 = arith.constant 0 : i32
    %c0_i32_0 = arith.constant 0 : i32
    %c0_i32_1 = arith.constant 0 : i32
    return %arg0, %c0_i32, %c0_i32_0 : i32, i32, i32
  }
  func.func @transform_1(%arg0: i32) -> (i32, i32) {
    %c0_i32 = arith.constant 0 : i32
    %c0_i32_0 = arith.constant 0 : i32
    %c0_i32_1 = arith.constant 0 : i32
    return %c0_i32, %c0_i32_0 : i32, i32
  }
  func.func @transform_2(%arg0: i32) -> (i32, i32) {
    %c0_i32 = arith.constant 0 : i32
    %c0_i32_0 = arith.constant 0 : i32
    %c0_i32_1 = arith.constant 0 : i32
    return %c0_i32, %c0_i32_0 : i32, i32
  }
  func.func @transform_3(%arg0: i32) -> (i32, i32) {
    %c0_i32 = arith.constant 0 : i32
    %c0_i32_0 = arith.constant 0 : i32
    %c0_i32_1 = arith.constant 0 : i32
    return %c0_i32, %c0_i32_0 : i32, i32
  }
  func.func @transform_4(%arg0: i32) -> (i32, i32, i32) {
    %c0_i32 = arith.constant 0 : i32
    %c0_i32_0 = arith.constant 0 : i32
    %c0_i32_1 = arith.constant 0 : i32
    %c0_i32_2 = arith.constant 0 : i32
    return %c0_i32, %c0_i32_0, %c0_i32_1 : i32, i32, i32
  }
  func.func @transform_5(%arg0: i32) -> (i32, i32) {
    %c0_i32 = arith.constant 0 : i32
    %c0_i32_0 = arith.constant 0 : i32
    %c0_i32_1 = arith.constant 0 : i32
    return %c0_i32, %c0_i32_0 : i32, i32
  }
  func.func @transform_6(%arg0: i32) -> (i32, i32) {
    %c0_i32 = arith.constant 0 : i32
    %c0_i32_0 = arith.constant 0 : i32
    %c0_i32_1 = arith.constant 0 : i32
    return %c0_i32, %c0_i32_0 : i32, i32
  }
  func.func @transform_7(%arg0: i32) -> (i32, i32) {
    %c0_i32 = arith.constant 0 : i32
    %c0_i32_0 = arith.constant 0 : i32
    %c0_i32_1 = arith.constant 0 : i32
    return %c0_i32, %c0_i32_0 : i32, i32
  }
  func.func @transform_8(%arg0: i32) -> (i32, i32) {
    %c0_i32 = arith.constant 0 : i32
    %c0_i32_0 = arith.constant 0 : i32
    %c0_i32_1 = arith.constant 0 : i32
    return %c0_i32, %c0_i32_0 : i32, i32
  }
  func.func @transform_9(%arg0: i32) -> (i32, i32) {
    %c0_i32 = arith.constant 0 : i32
    %c0_i32_0 = arith.constant 0 : i32
    %c0_i32_1 = arith.constant 0 : i32
    return %c0_i32, %c0_i32_0 : i32, i32
  }
  func.func @transform_10(%arg0: i32) -> (i32, i32, i32) {
    %c0_i32 = arith.constant 0 : i32
    %c0_i32_0 = arith.constant 0 : i32
    %c0_i32_1 = arith.constant 0 : i32
    return %arg0, %c0_i32, %c0_i32_0 : i32, i32, i32
  }
}

</mosaic_0001>

<llo_original>
// kernel: tpu_custom_call.1
$region0: #{tpu_custom_call.1}
  #allocation0 [shape = 'u32[]', space=smem, size = 0x4, offset = 0x4, fixed_abs, tag = 'smem constant byte address 0x4 - core index']
  #allocation1 [shape = 'u32[144,128]{1,0:T(1,128)}', space=vmem, size = 0x12000, scoped, tag = 'internal scratch']
  #allocation2 [shape = 'f32[4,512]{1,0:T(4,128)}', space=vmem, size = 0x2000, scoped, tag = 'scratch operand']
  %s0 = inlined_call_operand.vmem [shape: bf16[2,4,256], index: 0, kind: input, shape index: {}]
  %s1 = inlined_call_operand.vmem [shape: bf16[4,4], index: 1, kind: input, shape index: {}]
  %s2 = inlined_call_operand.vmem [shape: f32[4,1], index: 2, kind: input, shape index: {}]
  %s3 = inlined_call_operand.vmem [shape: f32[4,1], index: 3, kind: input, shape index: {}]
  %s4 = inlined_call_operand.vmem [shape: f32[25,4,1], index: 4, kind: input, shape index: {}]
  %s5 = inlined_call_operand.vmem [shape: f32[4,1], index: 5, kind: input, shape index: {}]
  %s6 = inlined_call_operand.vmem [shape: f32[4,1], index: 6, kind: input, shape index: {}]
  %s7 = inlined_call_operand.vmem [shape: bf16[8,8], index: 7, kind: input, shape index: {}]
  %s8 = inlined_call_operand.vmem [shape: f32[8,1], index: 8, kind: input, shape index: {}]
  %s9 = inlined_call_operand.vmem [shape: f32[8,1], index: 9, kind: input, shape index: {}]
  %s10 = inlined_call_operand.hbm [shape: bf16[2,8,256], index: 10, kind: output, shape index: {}]
  %s11 = sld [smem:[#allocation0]]
  $region73: #{tpu_custom_call.1} parent=0
    _
  %s13 = ssub.s32 1, %s11
  %s14 = scalar_select 0, %s13, %s11
  $region1: #{tpu_custom_call.1} parent=0
    #allocation3 [shape = 'u8[8192]{0}', space=vmem, size = 0x2000, scoped, tag = 'output window, operand 0']
    #allocation4 [shape = 's32[2]{0}', space=sflag, size = 0x8, scoped, tag = 'scoped memory for tpu_custom_call.1']
    %15 = vsyncpa [#allocation4], 0
    %s16 = scalar_lea.sflag [#allocation4], 1
    %17 = vsyncpa %s16, 0
    loop: start=0, step=1, limit=4
    $region2: #{tpu_custom_call.1} parent=1 // loop_pre_header
      _
    $region3: #{tpu_custom_call.1} parent=1 // loop_header
      %s19 = sphi 0, %s23
      %p20 = scmp.ge.s32.totalorder %s19, 4
      %s29 = sphi 0, %s31
      %s32 = sphi 0, %s29
      %s33 = sphi 0, %s32
      %s49 = sphi 0, %s33
      %s53 = sphi 0, %s53
      %s55 = sphi 0, %s53
      %s56 = sphi 0, %s55
      %s70 = sphi 0, %s56
      %s74 = sphi 0, %s74
      %s76 = sphi 0, %s74
      %s77 = sphi 0, %s76
      %s91 = sphi 0, %s77
      %s95 = sphi 0, %s95
      %s97 = sphi 0, %s95
      %s98 = sphi 0, %s97
      %s112 = sphi 0, %s98
      %s116 = sphi 0, %s116
      %s118 = sphi 0, %s116
      %s119 = sphi 0, %s118
      %s133 = sphi 0, %s119
      %s137 = sphi 0, %s137
      %s139 = sphi 0, %s137
      %s140 = sphi 0, %s139
      %s154 = sphi 0, %s140
      %s158 = sphi 0, %s158
      %s160 = sphi 0, %s158
      %s161 = sphi 0, %s160
      %s175 = sphi 0, %s161
      %s179 = sphi 0, %s179
      %s181 = sphi 0, %s179
      %s182 = sphi 0, %s181
      %s196 = sphi 0, %s182
      %s200 = sphi 0, %s200
      %s202 = sphi 0, %s200
      %s203 = sphi 0, %s202
      %s217 = sphi 0, %s203
      %s221 = sphi 0, %s221
      %s223 = sphi 0, %s221
      %s224 = sphi 0, %s223
      %s238 = sphi 0, %s224
      %s244 = sphi 0, %s246
      %s247 = sphi 0, %s244
      %s248 = sphi 0, %s247
      %s264 = sphi 0, %s248
    $region4: #{tpu_custom_call.1} parent=1 // loop_header_branch
      %22 = sbr.rel (%p20) target = $region8
    $region5: #{tpu_custom_call.1} parent=1 // loop_body
      %s24 = ssub.s32 %s19, 1
      %s25 = ssub.s32 %s19, 2
      %s26 = sadd.s32 %s19, 1
      %s27 = ssub.s32 %s19, %s26
      %p28 = scmp.eq.s32.totalorder %s27, 0
      %s30 = sadd.s32 %s29, 1
      %s31 = scalar_select %p28, %s29, %s30
      %p34 = pneg %p28
      %p35 = scmp.eq.s32.totalorder %s19, 1
      %p36 = por %p34, %p35
      %p37 = scmp.ne.s32.totalorder %s29, %s32
      %p38 = scmp.eq.s32.totalorder %s19, 0
      %p39 = por %p37, %p38
      %p40 = scmp.ne.s32.totalorder %s29, %s32
      %p41 = scmp.eq.s32.totalorder %s24, 1
      %p42 = por %p40, %p41
      %p43 = scmp.ne.s32.totalorder %s32, %s33
      %p44 = scmp.eq.s32.totalorder %s24, 0
      %p45 = por %p43, %p44
      %p46 = scmp.ne.s32.totalorder %s32, %s33
      %p47 = scmp.eq.s32.totalorder %s25, 1
      %p48 = por %p46, %p47
      %p50 = scmp.ne.s32.totalorder %s33, %s49
      %p51 = scmp.eq.s32.totalorder %s25, 0
      %p52 = por %p50, %p51
      %s54 = sadd.s32 %s53, 1
      %p57 = scmp.eq.s32.totalorder %s19, 1
      %p58 = scmp.ne.s32.totalorder %s53, %s55
      %p59 = scmp.eq.s32.totalorder %s19, 0
      %p60 = por %p58, %p59
      %p61 = scmp.ne.s32.totalorder %s53, %s55
      %p62 = scmp.eq.s32.totalorder %s24, 1
      %p63 = por %p61, %p62
      %p64 = scmp.ne.s32.totalorder %s55, %s56
      %p65 = scmp.eq.s32.totalorder %s24, 0
      %p66 = por %p64, %p65
      %p67 = scmp.ne.s32.totalorder %s55, %s56
      %p68 = scmp.eq.s32.totalorder %s25, 1
      %p69 = por %p67, %p68
      %p71 = scmp.ne.s32.totalorder %s56, %s70
      %p72 = scmp.eq.s32.totalorder %s25, 0
      %p73 = por %p71, %p72
      %s75 = sadd.s32 %s74, 1
      %p78 = scmp.eq.s32.totalorder %s19, 1
      %p79 = scmp.ne.s32.totalorder %s74, %s76
      %p80 = scmp.eq.s32.totalorder %s19, 0
      %p81 = por %p79, %p80
      %p82 = scmp.ne.s32.totalorder %s74, %s76
      %p83 = scmp.eq.s32.totalorder %s24, 1
      %p84 = por %p82, %p83
      %p85 = scmp.ne.s32.totalorder %s76, %s77
      %p86 = scmp.eq.s32.totalorder %s24, 0
      %p87 = por %p85, %p86
      %p88 = scmp.ne.s32.totalorder %s76, %s77
      %p89 = scmp.eq.s32.totalorder %s25, 1
      %p90 = por %p88, %p89
      %p92 = scmp.ne.s32.totalorder %s77, %s91
      %p93 = scmp.eq.s32.totalorder %s25, 0
      %p94 = por %p92, %p93
      %s96 = sadd.s32 %s95, 1
      %p99 = scmp.eq.s32.totalorder %s19, 1
      %p100 = scmp.ne.s32.totalorder %s95, %s97
      %p101 = scmp.eq.s32.totalorder %s19, 0
      %p102 = por %p100, %p101
      %p103 = scmp.ne.s32.totalorder %s95, %s97
      %p104 = scmp.eq.s32.totalorder %s24, 1
      %p105 = por %p103, %p104
      %p106 = scmp.ne.s32.totalorder %s97, %s98
      %p107 = scmp.eq.s32.totalorder %s24, 0
      %p108 = por %p106, %p107
      %p109 = scmp.ne.s32.totalorder %s97, %s98
      %p110 = scmp.eq.s32.totalorder %s25, 1
      %p111 = por %p109, %p110
      %p113 = scmp.ne.s32.totalorder %s98, %s112
      %p114 = scmp.eq.s32.totalorder %s25, 0
      %p115 = por %p113, %p114
      %s117 = sadd.s32 %s116, 1
      %p120 = scmp.eq.s32.totalorder %s19, 1
      %p121 = scmp.ne.s32.totalorder %s116, %s118
      %p122 = scmp.eq.s32.totalorder %s19, 0
      %p123 = por %p121, %p122
      %p124 = scmp.ne.s32.totalorder %s116, %s118
      %p125 = scmp.eq.s32.totalorder %s24, 1
      %p126 = por %p124, %p125
      %p127 = scmp.ne.s32.totalorder %s118, %s119
      %p128 = scmp.eq.s32.totalorder %s24, 0
      %p129 = por %p127, %p128
      %p130 = scmp.ne.s32.totalorder %s118, %s119
      %p131 = scmp.eq.s32.totalorder %s25, 1
      %p132 = por %p130, %p131
      %p134 = scmp.ne.s32.totalorder %s119, %s133
      %p135 = scmp.eq.s32.totalorder %s25, 0
      %p136 = por %p134, %p135
      %s138 = sadd.s32 %s137, 1
      %p141 = scmp.eq.s32.totalorder %s19, 1
      %p142 = scmp.ne.s32.totalorder %s137, %s139
      %p143 = scmp.eq.s32.totalorder %s19, 0
      %p144 = por %p142, %p143
      %p145 = scmp.ne.s32.totalorder %s137, %s139
      %p146 = scmp.eq.s32.totalorder %s24, 1
      %p147 = por %p145, %p146
      %p148 = scmp.ne.s32.totalorder %s139, %s140
      %p149 = scmp.eq.s32.totalorder %s24, 0
      %p150 = por %p148, %p149
      %p151 = scmp.ne.s32.totalorder %s139, %s140
      %p152 = scmp.eq.s32.totalorder %s25, 1
      %p153 = por %p151, %p152
      %p155 = scmp.ne.s32.totalorder %s140, %s154
      %p156 = scmp.eq.s32.totalorder %s25, 0
      %p157 = por %p155, %p156
      %s159 = sadd.s32 %s158, 1
      %p162 = scmp.eq.s32.totalorder %s19, 1
      %p163 = scmp.ne.s32.totalorder %s158, %s160
      %p164 = scmp.eq.s32.totalorder %s19, 0
      %p165 = por %p163, %p164
      %p166 = scmp.ne.s32.totalorder %s158, %s160
      %p167 = scmp.eq.s32.totalorder %s24, 1
      %p168 = por %p166, %p167
      %p169 = scmp.ne.s32.totalorder %s160, %s161
      %p170 = scmp.eq.s32.totalorder %s24, 0
      %p171 = por %p169, %p170
      %p172 = scmp.ne.s32.totalorder %s160, %s161
      %p173 = scmp.eq.s32.totalorder %s25, 1
      %p174 = por %p172, %p173
      %p176 = scmp.ne.s32.totalorder %s161, %s175
      %p177 = scmp.eq.s32.totalorder %s25, 0
      %p178 = por %p176, %p177
      %s180 = sadd.s32 %s179, 1
      %p183 = scmp.eq.s32.totalorder %s19, 1
      %p184 = scmp.ne.s32.totalorder %s179, %s181
      %p185 = scmp.eq.s32.totalorder %s19, 0
      %p186 = por %p184, %p185
      %p187 = scmp.ne.s32.totalorder %s179, %s181
      %p188 = scmp.eq.s32.totalorder %s24, 1
      %p189 = por %p187, %p188
      %p190 = scmp.ne.s32.totalorder %s181, %s182
      %p191 = scmp.eq.s32.totalorder %s24, 0
      %p192 = por %p190, %p191
      %p193 = scmp.ne.s32.totalorder %s181, %s182
      %p194 = scmp.eq.s32.totalorder %s25, 1
      %p195 = por %p193, %p194
      %p197 = scmp.ne.s32.totalorder %s182, %s196
      %p198 = scmp.eq.s32.totalorder %s25, 0
      %p199 = por %p197, %p198
      %s201 = sadd.s32 %s200, 1
      %p204 = scmp.eq.s32.totalorder %s19, 1
      %p205 = scmp.ne.s32.totalorder %s200, %s202
      %p206 = scmp.eq.s32.totalorder %s19, 0
      %p207 = por %p205, %p206
      %p208 = scmp.ne.s32.totalorder %s200, %s202
      %p209 = scmp.eq.s32.totalorder %s24, 1
      %p210 = por %p208, %p209
      %p211 = scmp.ne.s32.totalorder %s202, %s203
      %p212 = scmp.eq.s32.totalorder %s24, 0
      %p213 = por %p211, %p212
      %p214 = scmp.ne.s32.totalorder %s202, %s203
      %p215 = scmp.eq.s32.totalorder %s25, 1
      %p216 = por %p214, %p215
      %p218 = scmp.ne.s32.totalorder %s203, %s217
      %p219 = scmp.eq.s32.totalorder %s25, 0
      %p220 = por %p218, %p219
      %s222 = sadd.s32 %s221, 1
      %p225 = scmp.eq.s32.totalorder %s19, 1
      %p226 = scmp.ne.s32.totalorder %s221, %s223
      %p227 = scmp.eq.s32.totalorder %s19, 0
      %p228 = por %p226, %p227
      %p229 = scmp.ne.s32.totalorder %s221, %s223
      %p230 = scmp.eq.s32.totalorder %s24, 1
      %p231 = por %p229, %p230
      %p232 = scmp.ne.s32.totalorder %s223, %s224
      %p233 = scmp.eq.s32.totalorder %s24, 0
      %p234 = por %p232, %p233
      %p235 = scmp.ne.s32.totalorder %s223, %s224
      %p236 = scmp.eq.s32.totalorder %s25, 1
      %p237 = por %p235, %p236
      %p239 = scmp.ne.s32.totalorder %s224, %s238
      %p240 = scmp.eq.s32.totalorder %s25, 0
      %p241 = por %p239, %p240
      %s242 = ssub.s32 %s19, %s26
      %p243 = scmp.eq.s32.totalorder %s242, 0
      %s245 = sadd.s32 %s244, 1
      %s246 = scalar_select %p243, %s244, %s245
      %p249 = pneg %p243
      %p250 = scmp.eq.s32.totalorder %s19, 1
      %p251 = por %p249, %p250
      %p252 = scmp.ne.s32.totalorder %s244, %s247
      %p253 = scmp.eq.s32.totalorder %s19, 0
      %p254 = por %p252, %p253
      %p255 = scmp.ne.s32.totalorder %s244, %s247
      %p256 = scmp.eq.s32.totalorder %s24, 1
      %p257 = por %p255, %p256
      %p258 = scmp.ne.s32.totalorder %s247, %s248
      %p259 = scmp.eq.s32.totalorder %s24, 0
      %p260 = por %p258, %p259
      %p261 = scmp.ne.s32.totalorder %s247, %s248
      %p262 = scmp.eq.s32.totalorder %s25, 1
      %p263 = por %p261, %p262
      %p265 = scmp.ne.s32.totalorder %s248, %s264
      %p266 = scmp.eq.s32.totalorder %s25, 0
      %p267 = por %p265, %p266
      %p268 = scmp.le.s32.totalorder 1, %s19
      %p269 = scmp.lt.s32.totalorder %s19, 3
      %p270 = pnand %p268, %p269
      %p271 = pneg %p270
      // Predicated region
      $region9: #{tpu_custom_call.1} parent=5 // pred_check
        _
      $region10: #{tpu_custom_call.1} parent=5 // pred_check_branch
        %273 = sbr.rel (%p270) target = $region12
      $region11: #{tpu_custom_call.1} parent=5 // pred_region
        %s274 = ssub.s32 %s19, 1
        // Predicated region
        $region13: #{tpu_custom_call.1} parent=11 // pred_check
          %p275 = pneg %p66
        $region14: #{tpu_custom_call.1} parent=11 // pred_check_branch
          %277 = sbr.rel (%p275) target = $region16
        $region15: #{tpu_custom_call.1} parent=11 // pred_region
          _
        $region16: #{tpu_custom_call.1} parent=11 // pred_fallthru
          _
        // Predicated region
        $region17: #{tpu_custom_call.1} parent=11 // pred_check
          %p278 = pneg %p87
        $region18: #{tpu_custom_call.1} parent=11 // pred_check_branch
          %280 = sbr.rel (%p278) target = $region20
        $region19: #{tpu_custom_call.1} parent=11 // pred_region
          _
        $region20: #{tpu_custom_call.1} parent=11 // pred_fallthru
          _
        // Predicated region
        $region21: #{tpu_custom_call.1} parent=11 // pred_check
          %p281 = pneg %p108
        $region22: #{tpu_custom_call.1} parent=11 // pred_check_branch
          %283 = sbr.rel (%p281) target = $region24
        $region23: #{tpu_custom_call.1} parent=11 // pred_region
          _
        $region24: #{tpu_custom_call.1} parent=11 // pred_fallthru
          _
        // Predicated region
        $region25: #{tpu_custom_call.1} parent=11 // pred_check
          %p284 = pneg %p129
        $region26: #{tpu_custom_call.1} parent=11 // pred_check_branch
          %286 = sbr.rel (%p284) target = $region28
        $region27: #{tpu_custom_call.1} parent=11 // pred_region
          _
        $region28: #{tpu_custom_call.1} parent=11 // pred_fallthru
          _
        // Predicated region
        $region29: #{tpu_custom_call.1} parent=11 // pred_check
          %p287 = pneg %p150
        $region30: #{tpu_custom_call.1} parent=11 // pred_check_branch
          %289 = sbr.rel (%p287) target = $region32
        $region31: #{tpu_custom_call.1} parent=11 // pred_region
          _
        $region32: #{tpu_custom_call.1} parent=11 // pred_fallthru
          _
        // Predicated region
        $region33: #{tpu_custom_call.1} parent=11 // pred_check
          %p290 = pneg %p171
        $region34: #{tpu_custom_call.1} parent=11 // pred_check_branch
          %292 = sbr.rel (%p290) target = $region36
        $region35: #{tpu_custom_call.1} parent=11 // pred_region
          _
        $region36: #{tpu_custom_call.1} parent=11 // pred_fallthru
          _
        // Predicated region
        $region37: #{tpu_custom_call.1} parent=11 // pred_check
          %p293 = pneg %p192
        $region38: #{tpu_custom_call.1} parent=11 // pred_check_branch
          %295 = sbr.rel (%p293) target = $region40
        $region39: #{tpu_custom_call.1} parent=11 // pred_region
          _
        $region40: #{tpu_custom_call.1} parent=11 // pred_fallthru
          _
        // Predicated region
        $region41: #{tpu_custom_call.1} parent=11 // pred_check
          %p296 = pneg %p213
        $region42: #{tpu_custom_call.1} parent=11 // pred_check_branch
          %298 = sbr.rel (%p296) target = $region44
        $region43: #{tpu_custom_call.1} parent=11 // pred_region
          _
        $region44: #{tpu_custom_call.1} parent=11 // pred_fallthru
          _
        // Predicated region
        $region45: #{tpu_custom_call.1} parent=11 // pred_check
          %p299 = pneg %p234
        $region46: #{tpu_custom_call.1} parent=11 // pred_check_branch
          %301 = sbr.rel (%p299) target = $region48
        $region47: #{tpu_custom_call.1} parent=11 // pred_region
          _
        $region48: #{tpu_custom_call.1} parent=11 // pred_fallthru
          _
      $region12: #{tpu_custom_call.1} parent=5 // pred_fallthru
        _
      %p302 = scmp.lt.s32.totalorder %s19, 2
      // Predicated region
      $region49: #{tpu_custom_call.1} parent=5 // pred_check
        %p303 = pneg %p302
      $region50: #{tpu_custom_call.1} parent=5 // pred_check_branch
        %305 = sbr.rel (%p303) target = $region52
      $region51: #{tpu_custom_call.1} parent=5 // pred_region
        // Predicated region
        $region53: #{tpu_custom_call.1} parent=51 // pred_check
          %p306 = pneg %p39
        $region54: #{tpu_custom_call.1} parent=51 // pred_check_branch
          %308 = sbr.rel (%p306) target = $region56
        $region55: #{tpu_custom_call.1} parent=51 // pred_region
          %p309 = scmp.lt.s32.totalorder %s19, 1
          %s310 = scalar_select %p309, %s19, 1
          %s311 = smul.addr %s310, 2
          %s312 = smul.addr %s311, 2
          %s313 = scalar_lea.vmem %s0, %s312
        $region56: #{tpu_custom_call.1} parent=51 // pred_fallthru
          _
      $region52: #{tpu_custom_call.1} parent=5 // pred_fallthru
        _
      %p314 = scmp.le.s32.totalorder 1, %s19
      %p315 = scmp.lt.s32.totalorder %s19, 3
      %p316 = pnand %p314, %p315
      %p317 = pneg %p316
      // Predicated region
      $region57: #{tpu_custom_call.1} parent=5 // pred_check
        _
      $region58: #{tpu_custom_call.1} parent=5 // pred_check_branch
        %319 = sbr.rel (%p316) target = $region60
      $region59: #{tpu_custom_call.1} parent=5 // pred_region
        %s320 = ssub.s32 %s19, 1
        %p321 = scmp.lt.s32.totalorder %s24, 1
        %s322 = scalar_select %p321, %s24, 1
        %s323 = smul.addr %s322, 2
        %s324 = smul.addr %s323, 2
        %s325 = scalar_lea.vmem %s0, %s324
        %p326 = pneg %p45
        %p327 = pneg %p42
        %p328 = pneg %p66
        %p329 = pneg %p63
        %p330 = pneg %p87
        %p331 = pneg %p84
        %p332 = pneg %p108
        %p333 = pneg %p105
        %p334 = pneg %p129
        %p335 = pneg %p126
        %p336 = pneg %p150
        %p337 = pneg %p147
        %p338 = pneg %p171
        %p339 = pneg %p168
        %p340 = pneg %p192
        %p341 = pneg %p189
        %p342 = pneg %p213
        %p343 = pneg %p210
        %p344 = pneg %p234
        %p345 = pneg %p231
        %p346 = pneg %p260
        %p347 = pneg %p257
        %s348 = sand.u32 %s247, 1
        %s349 = scalar_lea.sflag [#allocation4], %s348
        %s350 = sand.u32 %s247, 1
        %s351 = smul.addr %s350, 8
        %s352 = scalar_lea.vmem [#allocation3], %s351
        %p353 = scmp.lt.s32.totalorder %s24, 1
        %s354 = scalar_select %p353, %s24, 1
        %s355 = smul.addr %s354, 2
        %s356 = smul.addr %s355, 2
        %s357 = scalar_lea.vmem %s0, %s356
        %v359 = vld [vmem:[%s1] sm:$0x3]
        %v360 = vld [vmem:[%s2] sm:$0xf]
        %v361 = vld [vmem:[%s3] sm:$0xf]
        %v362 = vld [vmem:[%s4] sm:$0xf]
        %s363 = scalar_lea.vmem %s4, 4
        %v364 = vld [vmem:[%s363] sm:$0xf]
        %s365 = scalar_lea.vmem %s4, 8
        %v366 = vld [vmem:[%s365] sm:$0xf]
        %s367 = scalar_lea.vmem %s4, 12
        %v368 = vld [vmem:[%s367] sm:$0xf]
        %s369 = scalar_lea.vmem %s4, 16
        %v370 = vld [vmem:[%s369] sm:$0xf]
        %s371 = scalar_lea.vmem %s4, 20
        %v372 = vld [vmem:[%s371] sm:$0xf]
        %s373 = scalar_lea.vmem %s4, 24
        %v374 = vld [vmem:[%s373] sm:$0xf]
        %s375 = scalar_lea.vmem %s4, 28
        %v376 = vld [vmem:[%s375] sm:$0xf]
        %s377 = scalar_lea.vmem %s4, 32
        %v378 = vld [vmem:[%s377] sm:$0xf]
        %s379 = scalar_lea.vmem %s4, 36
        %v380 = vld [vmem:[%s379] sm:$0xf]
        %s381 = scalar_lea.vmem %s4, 40
        %v382 = vld [vmem:[%s381] sm:$0xf]
        %s383 = scalar_lea.vmem %s4, 44
        %v384 = vld [vmem:[%s383] sm:$0xf]
        %s385 = scalar_lea.vmem %s4, 48
        %v386 = vld [vmem:[%s385] sm:$0xf]
        %s387 = scalar_lea.vmem %s4, 52
        %v388 = vld [vmem:[%s387] sm:$0xf]
        %s389 = scalar_lea.vmem %s4, 56
        %v390 = vld [vmem:[%s389] sm:$0xf]
        %s391 = scalar_lea.vmem %s4, 60
        %v392 = vld [vmem:[%s391] sm:$0xf]
        %s393 = scalar_lea.vmem %s4, 64
        %v394 = vld [vmem:[%s393] sm:$0xf]
        %s395 = scalar_lea.vmem %s4, 68
        %v396 = vld [vmem:[%s395] sm:$0xf]
        %s397 = scalar_lea.vmem %s4, 72
        %v398 = vld [vmem:[%s397] sm:$0xf]
        %s399 = scalar_lea.vmem %s4, 76
        %v400 = vld [vmem:[%s399] sm:$0xf]
        %s401 = scalar_lea.vmem %s4, 80
        %v402 = vld [vmem:[%s401] sm:$0xf]
        %s403 = scalar_lea.vmem %s4, 84
        %v404 = vld [vmem:[%s403] sm:$0xf]
        %s405 = scalar_lea.vmem %s4, 88
        %v406 = vld [vmem:[%s405] sm:$0xf]
        %s407 = scalar_lea.vmem %s4, 92
        %v408 = vld [vmem:[%s407] sm:$0xf]
        %s409 = scalar_lea.vmem %s4, 96
        %v410 = vld [vmem:[%s409] sm:$0xf]
        %v411 = vld [vmem:[%s5] sm:$0xf]
        %v412 = vld [vmem:[%s6] sm:$0xf]
        %v413 = vld [vmem:[%s7] sm:$0xf]
        %v414 = vld [vmem:[%s8] sm:$0xff]
        %v415 = vld [vmem:[%s9] sm:$0xff]
        %416 = vst [vmem:[#allocation2] sm:$0xf] 0.0
        %417 = vst [vmem:[#allocation2 + $0xc] sm:$0xf] 0.0
        %v418 = vld [vmem:[%s357] sm:$0xf]
        %v421 = vunpack.c.l.s4 1983009808
        %v422 = vunpack.c.0.s8 %v421
        %v423 = vlaneseq
        %v424 = vshrl.u32 %v423, 7
        %v425 = vsub.s32 %v422, %v424
        %v426 = vrot.slane %v418, %v425
        %v427 = vcombine.high %v426, %v426
        %vm428 = vcmask 31744
        %v430 = vsel %vm428, %v359, 0
        %vm432 = vcmask 1041408
        %v434 = vsel %vm432, %v426, 0
        %v437 = vsel %vm432, %v427, 0
        %439 = vmatprep.subr.bf16.mxu0 %v437
        %440 = vmatpush1.bf16.msra.mxu0 %v434
        %441 = vmatprep.subr.bf16.mxu0 0
        %442 = vmatpush1.bf16.msra.mxu0 0
        %443 = vmatprep.subr.bf16.mxu0 0
        %444 = vmatpush1.bf16.msra.mxu0 0
        %445 = vmatprep.subr.bf16.mxu0 0
        %446 = vmatpush1.bf16.msra.mxu0 0
        %447 = vmatprep.subr.bf16.mxu0 0
        %448 = vmatpush1.bf16.msra.mxu0 0
        %449 = vmatprep.subr.bf16.mxu0 0
        %450 = vmatpush1.bf16.msra.mxu0 0
        %451 = vmatprep.subr.bf16.mxu0 0
        %452 = vmatpush1.bf16.msra.mxu0 0
        %453 = vmatprep.subr.bf16.mxu0 0
        %454 = vmatpush1.bf16.msra.mxu0 0
        %455 = vmatprep.subr.bf16.mxu0 0
        %456 = vmatpush1.bf16.msra.mxu0 0
        %457 = vmatprep.subr.bf16.mxu0 0
        %458 = vmatpush1.bf16.msra.mxu0 0
        %459 = vmatprep.subr.bf16.mxu0 0
        %460 = vmatpush1.bf16.msra.mxu0 0
        %461 = vmatprep.subr.bf16.mxu0 0
        %462 = vmatpush1.bf16.msra.mxu0 0
        %463 = vmatprep.subr.bf16.mxu0 0
        %464 = vmatpush1.bf16.msra.mxu0 0
        %465 = vmatprep.subr.bf16.mxu0 0
        %466 = vmatpush1.bf16.msra.mxu0 0
        %467 = vmatprep.subr.bf16.mxu0 0
        %468 = vmatpush1.bf16.msra.mxu0 0
        %469 = vmatprep.subr.bf16.mxu0 0
        %470 = vmatpush1.bf16.msra.mxu0 0
        %471 = vmatprep.mubr.bf16.mxu0 0
        %472 = vmatmul.mubr.bf16.gmra.mrb[0].mxu0 %v430
        %v473 = vpop.f32.mrb[0].mxu0
        %v474 = vadd.f32 0.0, %v473
        %v475 = vpop.f32.mrb[0].mxu0
        %v476 = vadd.f32 0.0, %v475
        %v477 = vpop.f32.mrb[0].mxu0
        %v478 = vpop.f32.mrb[0].mxu0
        %479 = vdwg.mxu0
        %481 = vset.pattern.permute.xlu0 0
        %482 = vperm.xlu0 %481, %v360
        %v483 = vpop.permute.xlu0 %482
        %v485 = vmul.f32 %v474, %v483
        %v486 = vmul.f32 %v476, %v483
        %488 = vset.pattern.permute.xlu0 0
        %489 = vperm.xlu0 %488, %v361
        %v490 = vpop.permute.xlu0 %489
        %v492 = vadd.f32 %v485, %v490
        %v493 = vadd.f32 %v486, %v490
        %v494 = vsub.f32 0.0, %v492
        %v495 = vsub.f32 0.0, %v493
        %v496 = vmul.f32 %v494, 1.442695
        %v497 = vpow.pop %v496
        %v498 = vmul.f32 %v495, 1.442695
        %v499 = vpow.pop %v498
        %v500 = vadd.f32 %v497, 1.0
        %v501 = vadd.f32 %v499, 1.0
        %v502 = vrcp.pop %v500
        %v503 = vmul.f32 %v492, %v502
        %v504 = vrcp.pop %v501
        %v505 = vmul.f32 %v493, %v504
        %v508 = vcombine.low %v503, %v505
        %510 = vst [vmem:[#allocation2 + $0x4] sm:$0xff] %v508
        %v511 = vlaneseq
        %v512 = vand.u32 %v511, 127
        %v513 = vadd.s32 %v512, 128
        %vm514 = vcmp.lt.s32.totalorder %v512, 0
        %v515 = vsub.s32 0, %v512
        %v516 = vsel %vm514, %v515, %v512
        %v517 = vshrl.u32 %v516, 4
        %v518 = vand.u32 %v516, 15
        %v519 = vsub.s32 0, %v518
        %v520 = vsel %vm514, %v519, %v518
        %vm521 = vcmp.lt.s32.totalorder %v513, 0
        %v522 = vsub.s32 0, %v513
        %v523 = vsel %vm521, %v522, %v513
        %v524 = vshrl.u32 %v523, 4
        %v525 = vand.u32 %v523, 15
        %v526 = vsub.s32 0, %v525
        %v527 = vsel %vm521, %v526, %v525
        %vm528 = vcmp.ne.s32.totalorder %v520, 0
        %vm529 = vcmp.ne.s32.totalorder %v527, 0
        %vm530 = vcmp.lt.s32.totalorder %v520, 0
        %vm531 = vcmp.lt.s32.totalorder %v527, 0
        %vm532 = vmand %vm530, %vm528
        %vm533 = vmand %vm531, %vm529
        %v534 = vadd.s32 %v520, 16
        %v535 = vadd.s32 %v527, 16
        %v536 = vsel %vm532, %v534, %v520
        %v537 = vsel %vm533, %v535, %v527
        %v538 = vadd.s32 %v536, 4294967294
        %v539 = vadd.s32 %v537, 4294967294
        %vm540 = vcmp.ge.s32.totalorder %v538, 0
        %vm541 = vcmp.ge.s32.totalorder %v539, 0
        %vm542 = vcmp.lt.s32.totalorder %v538, 16
        %vm543 = vcmp.lt.s32.totalorder %v539, 16
        %vm544 = vmand %vm540, %vm542
        %vm545 = vmand %vm541, %vm543
        %v546 = vadd.s32 %v536, 4294967295
        %v547 = vadd.s32 %v537, 4294967295
        %vm548 = vcmp.ge.s32.totalorder %v546, 0
        %vm549 = vcmp.ge.s32.totalorder %v547, 0
        %vm550 = vcmp.lt.s32.totalorder %v546, 16
        %vm551 = vcmp.lt.s32.totalorder %v547, 16
        %vm552 = vmand %vm548, %vm550
        %vm553 = vmand %vm549, %vm551
        %v554 = vadd.s32 %v536, 1
        %v555 = vadd.s32 %v537, 1
        %vm556 = vcmp.ge.s32.totalorder %v554, 0
        %vm557 = vcmp.ge.s32.totalorder %v555, 0
        %vm558 = vcmp.lt.s32.totalorder %v554, 16
        %vm559 = vcmp.lt.s32.totalorder %v555, 16
        %vm560 = vmand %vm556, %vm558
        %vm561 = vmand %vm557, %vm559
        %v562 = vadd.s32 %v536, 2
        %v563 = vadd.s32 %v537, 2
        %vm564 = vcmp.ge.s32.totalorder %v562, 0
        %vm565 = vcmp.ge.s32.totalorder %v563, 0
        %vm566 = vcmp.lt.s32.totalorder %v562, 16
        %vm567 = vcmp.lt.s32.totalorder %v563, 16
        %vm568 = vmand %vm564, %vm566
        %vm569 = vmand %vm565, %vm567
        %v570 = vld [vmem:[#allocation2] sm:$0xff]
        %v571 = vld [vmem:[#allocation2 + $0x8] sm:$0xf]
        %573 = vset.pattern.permute.xlu0 0
        %574 = vperm.xlu0 %573, %v362
        %v575 = vpop.permute.xlu0 %574
        %v577 = vunpack.c.l.s4 839922192
        %v578 = vunpack.c.0.s8 %v577
        %v579 = vlaneseq
        %v580 = vshrl.u32 %v579, 7
        %v581 = vsub.s32 %v578, %v580
        %v582 = vrot.slane %v575, %v581
        %v584 = vmul.f32 %v570, %v582
        %v585 = vmul.f32 %v571, %v582
        %v586 = vadd.f32 %v584, 0.0
        %v587 = vadd.f32 %v585, 0.0
        %589 = vset.pattern.permute.xlu0 0
        %590 = vperm.xlu0 %589, %v372
        %v591 = vpop.permute.xlu0 %590
        %v593 = vunpack.c.l.s4 839922192
        %v594 = vunpack.c.0.s8 %v593
        %v595 = vlaneseq
        %v596 = vshrl.u32 %v595, 7
        %v597 = vsub.s32 %v594, %v596
        %v598 = vrot.slane %v591, %v597
        %v600 = vmul.f32 %v570, %v598
        %v601 = vmul.f32 %v571, %v598
        %604 = vrot.lane.b32.xlu0 %v600, 112
        %v605 = vpop.permute.xlu0 %604
        %606 = vrot.lane.b32.xlu0 %v601, 112
        %v607 = vpop.permute.xlu0 %606
        %v608 = vrot.slane %v605, 4
        %v609 = vrot.slane %v607, 4
        %vm610 = vcmask 1043456
        %v611 = vsel %vm610, %v608, %v609
        %vm612 = vcmask 916480
        %v613 = vsel %vm612, %v605, %v611
        %v616 = vadd.f32 %v586, %v613
        %v617 = vadd.f32 %v587, %v607
        %619 = vset.pattern.permute.xlu0 0
        %620 = vperm.xlu0 %619, %v382
        %v621 = vpop.permute.xlu0 %620
        %v623 = vunpack.c.l.s4 839922192
        %v624 = vunpack.c.0.s8 %v623
        %v625 = vlaneseq
        %v626 = vshrl.u32 %v625, 7
        %v627 = vsub.s32 %v624, %v626
        %v628 = vrot.slane %v621, %v627
        %v630 = vmul.f32 %v570, %v628
        %v631 = vmul.f32 %v571, %v628
        %634 = vrot.lane.b32.xlu0 %v630, 96
        %v635 = vpop.permute.xlu0 %634
        %636 = vrot.lane.b32.xlu0 %v631, 96
        %v637 = vpop.permute.xlu0 %636
        %v638 = vrot.slane %v635, 4
        %v639 = vrot.slane %v637, 4
        %v640 = vsel %vm610, %v638, %v639
        %vm641 = vcmask 785408
        %v642 = vsel %vm641, %v635, %v640
        %v645 = vadd.f32 %v616, %v642
        %v646 = vadd.f32 %v617, %v637
        %v647 = vld [vmem:[#allocation2 + $0x4] sm:$0xff]
        %v648 = vld [vmem:[#allocation2 + $0xc] sm:$0xf]
        %650 = vset.pattern.permute.xlu0 0
        %651 = vperm.xlu0 %650, %v392
        %v652 = vpop.permute.xlu0 %651
        %v654 = vunpack.c.l.s4 839922192
        %v655 = vunpack.c.0.s8 %v654
        %v656 = vlaneseq
        %v657 = vshrl.u32 %v656, 7
        %v658 = vsub.s32 %v655, %v657
        %v659 = vrot.slane %v652, %v658
        %v661 = vmul.f32 %v647, %v659
        %v662 = vmul.f32 %v648, %v659
        %665 = vrot.lane.b32.xlu0 %v661, 80
        %v666 = vpop.permute.xlu0 %665
        %667 = vrot.lane.b32.xlu0 %v662, 80
        %v668 = vpop.permute.xlu0 %667
        %v669 = vrot.slane %v666, 4
        %vm670 = vcmask 654336
        %v671 = vsel %vm670, %v669, %v666
        %v672 = vsel %vm670, %v669, %v668
        %v675 = vadd.f32 %v645, %v671
        %v676 = vadd.f32 %v646, %v672
        %678 = vset.pattern.permute.xlu0 0
        %679 = vperm.xlu0 %678, %v402
        %v680 = vpop.permute.xlu0 %679
        %v682 = vunpack.c.l.s4 839922192
        %v683 = vunpack.c.0.s8 %v682
        %v684 = vlaneseq
        %v685 = vshrl.u32 %v684, 7
        %v686 = vsub.s32 %v683, %v685
        %v687 = vrot.slane %v680, %v686
        %v689 = vmul.f32 %v647, %v687
        %v690 = vmul.f32 %v648, %v687
        %693 = vrot.lane.b32.xlu0 %v689, 64
        %v694 = vpop.permute.xlu0 %693
        %695 = vrot.lane.b32.xlu0 %v690, 64
        %v696 = vpop.permute.xlu0 %695
        %v697 = vrot.slane %v694, 4
        %vm698 = vcmask 523264
        %v699 = vsel %vm698, %v697, %v694
        %v700 = vsel %vm698, %v697, %v696
        %v703 = vadd.f32 %v675, %v699
        %v704 = vadd.f32 %v676, %v700
        %v705 = vsel %vm544, 1, 0
        %v706 = vsel %vm545, 1, 0
        %vm707 = vcmp.eq.s32.totalorder %v705, 1
        %vm708 = vcmp.eq.s32.totalorder %v706, 1
        %v711 = vcombine.high %v703, %v703
        %712 = vrot.lane.b32.xlu0 %v703, 34
        %v713 = vpop.permute.xlu0 %712
        %714 = vrot.lane.b32.xlu0 %v711, 34
        %v715 = vpop.permute.xlu0 %714
        %716 = vrot.lane.b32.xlu0 %v704, 34
        %v717 = vpop.permute.xlu0 %716
        %vm718 = vcmask 277504
        %v719 = vsel %vm718, %v713, %v715
        %v720 = vsel %vm718, %v715, %v717
        %v723 = vsel %vm707, %v719, 0.0
        %v724 = vsel %vm708, %v720, 0.0
        %v725 = vadd.f32 %v723, 0.0
        %v726 = vadd.f32 %v724, 0.0
        %v727 = vld [vmem:[#allocation2] sm:$0xff]
        %v728 = vld [vmem:[#allocation2 + $0x8] sm:$0xf]
        %730 = vset.pattern.permute.xlu0 0
        %731 = vperm.xlu0 %730, %v364
        %v732 = vpop.permute.xlu0 %731
        %v734 = vunpack.c.l.s4 839922192
        %v735 = vunpack.c.0.s8 %v734
        %v736 = vlaneseq
        %v737 = vshrl.u32 %v736, 7
        %v738 = vsub.s32 %v735, %v737
        %v739 = vrot.slane %v732, %v738
        %v741 = vmul.f32 %v727, %v739
        %v742 = vmul.f32 %v728, %v739
        %v743 = vadd.f32 %v741, 0.0
        %v744 = vadd.f32 %v742, 0.0
        %746 = vset.pattern.permute.xlu0 0
        %747 = vperm.xlu0 %746, %v374
        %v748 = vpop.permute.xlu0 %747
        %v750 = vunpack.c.l.s4 839922192
        %v751 = vunpack.c.0.s8 %v750
        %v752 = vlaneseq
        %v753 = vshrl.u32 %v752, 7
        %v754 = vsub.s32 %v751, %v753
        %v755 = vrot.slane %v748, %v754
        %v757 = vmul.f32 %v727, %v755
        %v758 = vmul.f32 %v728, %v755
        %761 = vrot.lane.b32.xlu0 %v757, 112
        %v762 = vpop.permute.xlu0 %761
        %763 = vrot.lane.b32.xlu0 %v758, 112
        %v764 = vpop.permute.xlu0 %763
        %v765 = vrot.slane %v762, 4
        %v766 = vrot.slane %v764, 4
        %v767 = vsel %vm610, %v765, %v766
        %v768 = vsel %vm612, %v762, %v767
        %v771 = vadd.f32 %v743, %v768
        %v772 = vadd.f32 %v744, %v764
        %774 = vset.pattern.permute.xlu0 0
        %775 = vperm.xlu0 %774, %v384
        %v776 = vpop.permute.xlu0 %775
        %v778 = vunpack.c.l.s4 839922192
        %v779 = vunpack.c.0.s8 %v778
        %v780 = vlaneseq
        %v781 = vshrl.u32 %v780, 7
        %v782 = vsub.s32 %v779, %v781
        %v783 = vrot.slane %v776, %v782
        %v785 = vmul.f32 %v727, %v783
        %v786 = vmul.f32 %v728, %v783
        %789 = vrot.lane.b32.xlu0 %v785, 96
        %v790 = vpop.permute.xlu0 %789
        %791 = vrot.lane.b32.xlu0 %v786, 96
        %v792 = vpop.permute.xlu0 %791
        %v793 = vrot.slane %v790, 4
        %v794 = vrot.slane %v792, 4
        %v795 = vsel %vm610, %v793, %v794
        %v796 = vsel %vm641, %v790, %v795
        %v799 = vadd.f32 %v771, %v796
        %v800 = vadd.f32 %v772, %v792
        %v801 = vld [vmem:[#allocation2 + $0x4] sm:$0xff]
        %v802 = vld [vmem:[#allocation2 + $0xc] sm:$0xf]
        %804 = vset.pattern.permute.xlu0 0
        %805 = vperm.xlu0 %804, %v394
        %v806 = vpop.permute.xlu0 %805
        %v808 = vunpack.c.l.s4 839922192
        %v809 = vunpack.c.0.s8 %v808
        %v810 = vlaneseq
        %v811 = vshrl.u32 %v810, 7
        %v812 = vsub.s32 %v809, %v811
        %v813 = vrot.slane %v806, %v812
        %v815 = vmul.f32 %v801, %v813
        %v816 = vmul.f32 %v802, %v813
        %819 = vrot.lane.b32.xlu0 %v815, 80
        %v820 = vpop.permute.xlu0 %819
        %821 = vrot.lane.b32.xlu0 %v816, 80
        %v822 = vpop.permute.xlu0 %821
        %v823 = vrot.slane %v820, 4
        %v824 = vsel %vm670, %v823, %v820
        %v825 = vsel %vm670, %v823, %v822
        %v828 = vadd.f32 %v799, %v824
        %v829 = vadd.f32 %v800, %v825
        %831 = vset.pattern.permute.xlu0 0
        %832 = vperm.xlu0 %831, %v404
        %v833 = vpop.permute.xlu0 %832
        %v835 = vunpack.c.l.s4 839922192
        %v836 = vunpack.c.0.s8 %v835
        %v837 = vlaneseq
        %v838 = vshrl.u32 %v837, 7
        %v839 = vsub.s32 %v836, %v838
        %v840 = vrot.slane %v833, %v839
        %v842 = vmul.f32 %v801, %v840
        %v843 = vmul.f32 %v802, %v840
        %846 = vrot.lane.b32.xlu0 %v842, 64
        %v847 = vpop.permute.xlu0 %846
        %848 = vrot.lane.b32.xlu0 %v843, 64
        %v849 = vpop.permute.xlu0 %848
        %v850 = vrot.slane %v847, 4
        %v851 = vsel %vm698, %v850, %v847
        %v852 = vsel %vm698, %v850, %v849
        %v855 = vadd.f32 %v828, %v851
        %v856 = vadd.f32 %v829, %v852
        %v857 = vsel %vm552, 1, 0
        %v858 = vsel %vm553, 1, 0
        %vm859 = vcmp.eq.s32.totalorder %v857, 1
        %vm860 = vcmp.eq.s32.totalorder %v858, 1
        %v863 = vcombine.high %v855, %v855
        %864 = vrot.lane.b32.xlu0 %v855, 33
        %v865 = vpop.permute.xlu0 %864
        %866 = vrot.lane.b32.xlu0 %v863, 33
        %v867 = vpop.permute.xlu0 %866
        %868 = vrot.lane.b32.xlu0 %v856, 33
        %v869 = vpop.permute.xlu0 %868
        %vm870 = vcmask 269312
        %v871 = vsel %vm870, %v865, %v867
        %v872 = vsel %vm870, %v867, %v869
        %v875 = vsel %vm859, %v871, 0.0
        %v876 = vsel %vm860, %v872, 0.0
        %v877 = vadd.f32 %v725, %v875
        %v878 = vadd.f32 %v726, %v876
        %v879 = vld [vmem:[#allocation2] sm:$0xff]
        %v880 = vld [vmem:[#allocation2 + $0x8] sm:$0xf]
        %882 = vset.pattern.permute.xlu0 0
        %883 = vperm.xlu0 %882, %v366
        %v884 = vpop.permute.xlu0 %883
        %v886 = vunpack.c.l.s4 839922192
        %v887 = vunpack.c.0.s8 %v886
        %v888 = vlaneseq
        %v889 = vshrl.u32 %v888, 7
        %v890 = vsub.s32 %v887, %v889
        %v891 = vrot.slane %v884, %v890
        %v893 = vmul.f32 %v879, %v891
        %v894 = vmul.f32 %v880, %v891
        %v895 = vadd.f32 %v893, 0.0
        %v896 = vadd.f32 %v894, 0.0
        %898 = vset.pattern.permute.xlu0 0
        %899 = vperm.xlu0 %898, %v376
        %v900 = vpop.permute.xlu0 %899
        %v902 = vunpack.c.l.s4 839922192
        %v903 = vunpack.c.0.s8 %v902
        %v904 = vlaneseq
        %v905 = vshrl.u32 %v904, 7
        %v906 = vsub.s32 %v903, %v905
        %v907 = vrot.slane %v900, %v906
        %v909 = vmul.f32 %v879, %v907
        %v910 = vmul.f32 %v880, %v907
        %913 = vrot.lane.b32.xlu0 %v909, 112
        %v914 = vpop.permute.xlu0 %913
        %915 = vrot.lane.b32.xlu0 %v910, 112
        %v916 = vpop.permute.xlu0 %915
        %v917 = vrot.slane %v914, 4
        %v918 = vrot.slane %v916, 4
        %v919 = vsel %vm610, %v917, %v918
        %v920 = vsel %vm612, %v914, %v919
        %v923 = vadd.f32 %v895, %v920
        %v924 = vadd.f32 %v896, %v916
        %v925 = vld [vmem:[#allocation2 + $0x4] sm:$0xff]
        %927 = vset.pattern.permute.xlu0 0
        %928 = vperm.xlu0 %927, %v386
        %v929 = vpop.permute.xlu0 %928
        %v931 = vunpack.c.l.s4 839922192
        %v932 = vunpack.c.0.s8 %v931
        %v933 = vlaneseq
        %v934 = vshrl.u32 %v933, 7
        %v935 = vsub.s32 %v932, %v934
        %v936 = vrot.slane %v929, %v935
        %v938 = vmul.f32 %v925, %v936
        %940 = vrot.lane.b32.xlu0 %v938, 96
        %v941 = vpop.permute.xlu0 %940
        %v942 = vrot.slane %v941, 4
        %v943 = vsel %vm641, %v942, %v941
        %v946 = vadd.f32 %v923, %v943
        %v947 = vadd.f32 %v924, %v942
        %v948 = vld [vmem:[#allocation2 + $0x4] sm:$0xff]
        %v949 = vld [vmem:[#allocation2 + $0xc] sm:$0xf]
        %951 = vset.pattern.permute.xlu0 0
        %952 = vperm.xlu0 %951, %v396
        %v953 = vpop.permute.xlu0 %952
        %v955 = vunpack.c.l.s4 839922192
        %v956 = vunpack.c.0.s8 %v955
        %v957 = vlaneseq
        %v958 = vshrl.u32 %v957, 7
        %v959 = vsub.s32 %v956, %v958
        %v960 = vrot.slane %v953, %v959
        %v962 = vmul.f32 %v948, %v960
        %v963 = vmul.f32 %v949, %v960
        %966 = vrot.lane.b32.xlu0 %v962, 80
        %v967 = vpop.permute.xlu0 %966
        %968 = vrot.lane.b32.xlu0 %v963, 80
        %v969 = vpop.permute.xlu0 %968
        %v970 = vrot.slane %v967, 4
        %v971 = vsel %vm670, %v970, %v967
        %v972 = vsel %vm670, %v970, %v969
        %v975 = vadd.f32 %v946, %v971
        %v976 = vadd.f32 %v947, %v972
        %978 = vset.pattern.permute.xlu0 0
        %979 = vperm.xlu0 %978, %v406
        %v980 = vpop.permute.xlu0 %979
        %v982 = vunpack.c.l.s4 839922192
        %v983 = vunpack.c.0.s8 %v982
        %v984 = vlaneseq
        %v985 = vshrl.u32 %v984, 7
        %v986 = vsub.s32 %v983, %v985
        %v987 = vrot.slane %v980, %v986
        %v989 = vmul.f32 %v948, %v987
        %v990 = vmul.f32 %v949, %v987
        %993 = vrot.lane.b32.xlu0 %v989, 64
        %v994 = vpop.permute.xlu0 %993
        %995 = vrot.lane.b32.xlu0 %v990, 64
        %v996 = vpop.permute.xlu0 %995
        %v997 = vrot.slane %v994, 4
        %v998 = vsel %vm698, %v997, %v994
        %v999 = vsel %vm698, %v997, %v996
        %v1002 = vadd.f32 %v975, %v998
        %v1003 = vadd.f32 %v976, %v999
        %v1006 = vcombine.high %v1002, %v1002
        %1007 = vrot.lane.b32.xlu0 %v1002, 32
        %v1008 = vpop.permute.xlu0 %1007
        %1009 = vrot.lane.b32.xlu0 %v1006, 32
        %v1010 = vpop.permute.xlu0 %1009
        %1011 = vrot.lane.b32.xlu0 %v1003, 32
        %v1012 = vpop.permute.xlu0 %1011
        %vm1013 = vcmask 261120
        %v1014 = vsel %vm1013, %v1008, %v1010
        %v1015 = vsel %vm1013, %v1010, %v1012
        %v1018 = vadd.f32 %v877, %v1014
        %v1019 = vadd.f32 %v878, %v1015
        %v1020 = vld [vmem:[#allocation2] sm:$0xff]
        %v1021 = vld [vmem:[#allocation2 + $0x8] sm:$0xf]
        %1023 = vset.pattern.permute.xlu0 0
        %1024 = vperm.xlu0 %1023, %v368
        %v1025 = vpop.permute.xlu0 %1024
        %v1027 = vunpack.c.l.s4 839922192
        %v1028 = vunpack.c.0.s8 %v1027
        %v1029 = vlaneseq
        %v1030 = vshrl.u32 %v1029, 7
        %v1031 = vsub.s32 %v1028, %v1030
        %v1032 = vrot.slane %v1025, %v1031
        %v1034 = vmul.f32 %v1020, %v1032
        %v1035 = vmul.f32 %v1021, %v1032
        %v1036 = vadd.f32 %v1034, 0.0
        %v1037 = vadd.f32 %v1035, 0.0
        %1039 = vset.pattern.permute.xlu0 0
        %1040 = vperm.xlu0 %1039, %v378
        %v1041 = vpop.permute.xlu0 %1040
        %v1043 = vunpack.c.l.s4 839922192
        %v1044 = vunpack.c.0.s8 %v1043
        %v1045 = vlaneseq
        %v1046 = vshrl.u32 %v1045, 7
        %v1047 = vsub.s32 %v1044, %v1046
        %v1048 = vrot.slane %v1041, %v1047
        %v1050 = vmul.f32 %v1020, %v1048
        %v1051 = vmul.f32 %v1021, %v1048
        %1054 = vrot.lane.b32.xlu0 %v1050, 112
        %v1055 = vpop.permute.xlu0 %1054
        %1056 = vrot.lane.b32.xlu0 %v1051, 112
        %v1057 = vpop.permute.xlu0 %1056
        %v1058 = vrot.slane %v1055, 4
        %v1059 = vrot.slane %v1057, 4
        %v1060 = vsel %vm610, %v1058, %v1059
        %v1061 = vsel %vm612, %v1055, %v1060
        %v1064 = vadd.f32 %v1036, %v1061
        %v1065 = vadd.f32 %v1037, %v1057
        %v1066 = vld [vmem:[#allocation2 + $0x4] sm:$0xff]
        %v1067 = vld [vmem:[#allocation2 + $0xc] sm:$0xf]
        %1069 = vset.pattern.permute.xlu0 0
        %1070 = vperm.xlu0 %1069, %v388
        %v1071 = vpop.permute.xlu0 %1070
        %v1073 = vunpack.c.l.s4 839922192
        %v1074 = vunpack.c.0.s8 %v1073
        %v1075 = vlaneseq
        %v1076 = vshrl.u32 %v1075, 7
        %v1077 = vsub.s32 %v1074, %v1076
        %v1078 = vrot.slane %v1071, %v1077
        %v1080 = vmul.f32 %v1066, %v1078
        %v1081 = vmul.f32 %v1067, %v1078
        %1084 = vrot.lane.b32.xlu0 %v1080, 96
        %v1085 = vpop.permute.xlu0 %1084
        %1086 = vrot.lane.b32.xlu0 %v1081, 96
        %v1087 = vpop.permute.xlu0 %1086
        %v1088 = vrot.slane %v1085, 4
        %v1089 = vsel %vm641, %v1088, %v1085
        %v1090 = vsel %vm641, %v1088, %v1087
        %v1093 = vadd.f32 %v1064, %v1089
        %v1094 = vadd.f32 %v1065, %v1090
        %1096 = vset.pattern.permute.xlu0 0
        %1097 = vperm.xlu0 %1096, %v398
        %v1098 = vpop.permute.xlu0 %1097
        %v1100 = vunpack.c.l.s4 839922192
        %v1101 = vunpack.c.0.s8 %v1100
        %v1102 = vlaneseq
        %v1103 = vshrl.u32 %v1102, 7
        %v1104 = vsub.s32 %v1101, %v1103
        %v1105 = vrot.slane %v1098, %v1104
        %v1107 = vmul.f32 %v1066, %v1105
        %v1108 = vmul.f32 %v1067, %v1105
        %1111 = vrot.lane.b32.xlu0 %v1107, 80
        %v1112 = vpop.permute.xlu0 %1111
        %1113 = vrot.lane.b32.xlu0 %v1108, 80
        %v1114 = vpop.permute.xlu0 %1113
        %v1115 = vrot.slane %v1112, 4
        %v1116 = vsel %vm670, %v1115, %v1112
        %v1117 = vsel %vm670, %v1115, %v1114
        %v1120 = vadd.f32 %v1093, %v1116
        %v1121 = vadd.f32 %v1094, %v1117
        %1123 = vset.pattern.permute.xlu0 0
        %1124 = vperm.xlu0 %1123, %v408
        %v1125 = vpop.permute.xlu0 %1124
        %v1127 = vunpack.c.l.s4 839922192
        %v1128 = vunpack.c.0.s8 %v1127
        %v1129 = vlaneseq
        %v1130 = vshrl.u32 %v1129, 7
        %v1131 = vsub.s32 %v1128, %v1130
        %v1132 = vrot.slane %v1125, %v1131
        %v1134 = vmul.f32 %v1066, %v1132
        %v1135 = vmul.f32 %v1067, %v1132
        %1138 = vrot.lane.b32.xlu0 %v1134, 64
        %v1139 = vpop.permute.xlu0 %1138
        %1140 = vrot.lane.b32.xlu0 %v1135, 64
        %v1141 = vpop.permute.xlu0 %1140
        %v1142 = vrot.slane %v1139, 4
        %v1143 = vsel %vm698, %v1142, %v1139
        %v1144 = vsel %vm698, %v1142, %v1141
        %v1147 = vadd.f32 %v1120, %v1143
        %v1148 = vadd.f32 %v1121, %v1144
        %v1149 = vsel %vm560, 1, 0
        %v1150 = vsel %vm561, 1, 0
        %vm1151 = vcmp.eq.s32.totalorder %v1149, 1
        %vm1152 = vcmp.eq.s32.totalorder %v1150, 1
        %v1155 = vcombine.high %v1147, %v1147
        %1156 = vrot.lane.b32.xlu0 %v1147, 31
        %v1157 = vpop.permute.xlu0 %1156
        %1158 = vrot.lane.b32.xlu0 %v1155, 31
        %v1159 = vpop.permute.xlu0 %1158
        %1160 = vrot.lane.b32.xlu0 %v1148, 31
        %v1161 = vpop.permute.xlu0 %1160
        %vm1162 = vcmask 252928
        %v1163 = vsel %vm1162, %v1157, %v1159
        %v1164 = vsel %vm1162, %v1159, %v1161
        %v1167 = vsel %vm1151, %v1163, 0.0
        %v1168 = vsel %vm1152, %v1164, 0.0
        %v1169 = vadd.f32 %v1018, %v1167
        %v1170 = vadd.f32 %v1019, %v1168
        %v1171 = vld [vmem:[#allocation2] sm:$0xff]
        %v1172 = vld [vmem:[#allocation2 + $0x8] sm:$0xf]
        %1174 = vset.pattern.permute.xlu0 0
        %1175 = vperm.xlu0 %1174, %v370
        %v1176 = vpop.permute.xlu0 %1175
        %v1178 = vunpack.c.l.s4 839922192
        %v1179 = vunpack.c.0.s8 %v1178
        %v1180 = vlaneseq
        %v1181 = vshrl.u32 %v1180, 7
        %v1182 = vsub.s32 %v1179, %v1181
        %v1183 = vrot.slane %v1176, %v1182
        %v1185 = vmul.f32 %v1171, %v1183
        %v1186 = vmul.f32 %v1172, %v1183
        %v1187 = vadd.f32 %v1185, 0.0
        %v1188 = vadd.f32 %v1186, 0.0
        %1190 = vset.pattern.permute.xlu0 0
        %1191 = vperm.xlu0 %1190, %v380
        %v1192 = vpop.permute.xlu0 %1191
        %v1194 = vunpack.c.l.s4 839922192
        %v1195 = vunpack.c.0.s8 %v1194
        %v1196 = vlaneseq
        %v1197 = vshrl.u32 %v1196, 7
        %v1198 = vsub.s32 %v1195, %v1197
        %v1199 = vrot.slane %v1192, %v1198
        %v1201 = vmul.f32 %v1171, %v1199
        %v1202 = vmul.f32 %v1172, %v1199
        %1205 = vrot.lane.b32.xlu0 %v1201, 112
        %v1206 = vpop.permute.xlu0 %1205
        %1207 = vrot.lane.b32.xlu0 %v1202, 112
        %v1208 = vpop.permute.xlu0 %1207
        %v1209 = vrot.slane %v1206, 4
        %v1210 = vrot.slane %v1208, 4
        %v1211 = vsel %vm610, %v1209, %v1210
        %v1212 = vsel %vm612, %v1206, %v1211
        %v1215 = vadd.f32 %v1187, %v1212
        %v1216 = vadd.f32 %v1188, %v1208
        %v1217 = vld [vmem:[#allocation2 + $0x4] sm:$0xff]
        %v1218 = vld [vmem:[#allocation2 + $0xc] sm:$0xf]
        %1220 = vset.pattern.permute.xlu0 0
        %1221 = vperm.xlu0 %1220, %v390
        %v1222 = vpop.permute.xlu0 %1221
        %v1224 = vunpack.c.l.s4 839922192
        %v1225 = vunpack.c.0.s8 %v1224
        %v1226 = vlaneseq
        %v1227 = vshrl.u32 %v1226, 7
        %v1228 = vsub.s32 %v1225, %v1227
        %v1229 = vrot.slane %v1222, %v1228
        %v1231 = vmul.f32 %v1217, %v1229
        %v1232 = vmul.f32 %v1218, %v1229
        %1235 = vrot.lane.b32.xlu0 %v1231, 96
        %v1236 = vpop.permute.xlu0 %1235
        %1237 = vrot.lane.b32.xlu0 %v1232, 96
        %v1238 = vpop.permute.xlu0 %1237
        %v1239 = vrot.slane %v1236, 4
        %v1240 = vsel %vm641, %v1239, %v1236
        %v1241 = vsel %vm641, %v1239, %v1238
        %v1244 = vadd.f32 %v1215, %v1240
        %v1245 = vadd.f32 %v1216, %v1241
        %1247 = vset.pattern.permute.xlu0 0
        %1248 = vperm.xlu0 %1247, %v400
        %v1249 = vpop.permute.xlu0 %1248
        %v1251 = vunpack.c.l.s4 839922192
        %v1252 = vunpack.c.0.s8 %v1251
        %v1253 = vlaneseq
        %v1254 = vshrl.u32 %v1253, 7
        %v1255 = vsub.s32 %v1252, %v1254
        %v1256 = vrot.slane %v1249, %v1255
        %v1258 = vmul.f32 %v1217, %v1256
        %v1259 = vmul.f32 %v1218, %v1256
        %1262 = vrot.lane.b32.xlu0 %v1258, 80
        %v1263 = vpop.permute.xlu0 %1262
        %1264 = vrot.lane.b32.xlu0 %v1259, 80
        %v1265 = vpop.permute.xlu0 %1264
        %v1266 = vrot.slane %v1263, 4
        %v1267 = vsel %vm670, %v1266, %v1263
        %v1268 = vsel %vm670, %v1266, %v1265
        %v1271 = vadd.f32 %v1244, %v1267
        %v1272 = vadd.f32 %v1245, %v1268
        %1274 = vset.pattern.permute.xlu0 0
        %1275 = vperm.xlu0 %1274, %v410
        %v1276 = vpop.permute.xlu0 %1275
        %v1278 = vunpack.c.l.s4 839922192
        %v1279 = vunpack.c.0.s8 %v1278
        %v1280 = vlaneseq
        %v1281 = vshrl.u32 %v1280, 7
        %v1282 = vsub.s32 %v1279, %v1281
        %v1283 = vrot.slane %v1276, %v1282
        %v1285 = vmul.f32 %v1217, %v1283
        %v1286 = vmul.f32 %v1218, %v1283
        %1289 = vrot.lane.b32.xlu0 %v1285, 64
        %v1290 = vpop.permute.xlu0 %1289
        %1291 = vrot.lane.b32.xlu0 %v1286, 64
        %v1292 = vpop.permute.xlu0 %1291
        %v1293 = vrot.slane %v1290, 4
        %v1294 = vsel %vm698, %v1293, %v1290
        %v1295 = vsel %vm698, %v1293, %v1292
        %v1298 = vadd.f32 %v1271, %v1294
        %v1299 = vadd.f32 %v1272, %v1295
        %v1300 = vsel %vm568, 1, 0
        %v1301 = vsel %vm569, 1, 0
        %vm1302 = vcmp.eq.s32.totalorder %v1300, 1
        %vm1303 = vcmp.eq.s32.totalorder %v1301, 1
        %v1306 = vcombine.high %v1298, %v1298
        %1307 = vrot.lane.b32.xlu0 %v1298, 30
        %v1308 = vpop.permute.xlu0 %1307
        %1309 = vrot.lane.b32.xlu0 %v1306, 30
        %v1310 = vpop.permute.xlu0 %1309
        %1311 = vrot.lane.b32.xlu0 %v1299, 30
        %v1312 = vpop.permute.xlu0 %1311
        %vm1313 = vcmask 244736
        %v1314 = vsel %vm1313, %v1308, %v1310
        %v1315 = vsel %vm1313, %v1310, %v1312
        %v1318 = vsel %vm1302, %v1314, 0.0
        %v1319 = vsel %vm1303, %v1315, 0.0
        %v1320 = vadd.f32 %v1169, %v1318
        %v1321 = vadd.f32 %v1170, %v1319
        %1323 = vset.pattern.permute.xlu0 0
        %1324 = vperm.xlu0 %1323, %v411
        %v1325 = vpop.permute.xlu0 %1324
        %v1327 = vmul.f32 %v1320, %v1325
        %v1328 = vmul.f32 %v1321, %v1325
        %1330 = vset.pattern.permute.xlu0 0
        %1331 = vperm.xlu0 %1330, %v412
        %v1332 = vpop.permute.xlu0 %1331
        %v1334 = vadd.f32 %v1327, %v1332
        %v1335 = vadd.f32 %v1328, %v1332
        %v1336 = vsub.f32 0.0, %v1334
        %v1337 = vsub.f32 0.0, %v1335
        %v1338 = vmul.f32 %v1336, 1.442695
        %v1339 = vpow.pop %v1338
        %v1340 = vmul.f32 %v1337, 1.442695
        %v1341 = vpow.pop %v1340
        %v1342 = vadd.f32 %v1339, 1.0
        %v1343 = vadd.f32 %v1341, 1.0
        %v1344 = vrcp.pop %v1342
        %v1345 = vmul.f32 %v1334, %v1344
        %v1346 = vrcp.pop %v1343
        %v1347 = vmul.f32 %v1335, %v1346
        %v1349 = vcombine.high %v925, %v925
        %v1351 = vpack.c.bf16 %v925, %v925
        %v1352 = vpack.c.bf16 %v1349, %v1349
        %v1353 = vpack.c.bf16 %v1345, %v1345
        %v1354 = vpack.c.bf16 %v1347, %v1347
        %v1356 = vunpack.c.l.b16 %v413
        %v1357 = vpack.c.b16 %v1356, %v1356
        %1358 = vrot.lane.b32.xlu0 %v1357, 124
        %v1359 = vpop.permute.xlu0 %1358
        %v1361 = vsel %vm428, %v1359, 0
        %v1364 = vsel %vm432, %v1353, 0
        %v1367 = vsel %vm432, %v1354, 0
        %1369 = vmatprep.subr.bf16.mxu0 %v1367
        %1370 = vmatpush1.bf16.msra.mxu0 %v1364
        %1371 = vmatprep.subr.bf16.mxu0 0
        %1372 = vmatpush1.bf16.msra.mxu0 0
        %1373 = vmatprep.subr.bf16.mxu0 0
        %1374 = vmatpush1.bf16.msra.mxu0 0
        %1375 = vmatprep.subr.bf16.mxu0 0
        %1376 = vmatpush1.bf16.msra.mxu0 0
        %1377 = vmatprep.subr.bf16.mxu0 0
        %1378 = vmatpush1.bf16.msra.mxu0 0
        %1379 = vmatprep.subr.bf16.mxu0 0
        %1380 = vmatpush1.bf16.msra.mxu0 0
        %1381 = vmatprep.subr.bf16.mxu0 0
        %1382 = vmatpush1.bf16.msra.mxu0 0
        %1383 = vmatprep.subr.bf16.mxu0 0
        %1384 = vmatpush1.bf16.msra.mxu0 0
        %1385 = vmatprep.subr.bf16.mxu0 0
        %1386 = vmatpush1.bf16.msra.mxu0 0
        %1387 = vmatprep.subr.bf16.mxu0 0
        %1388 = vmatpush1.bf16.msra.mxu0 0
        %1389 = vmatprep.subr.bf16.mxu0 0
        %1390 = vmatpush1.bf16.msra.mxu0 0
        %1391 = vmatprep.subr.bf16.mxu0 0
        %1392 = vmatpush1.bf16.msra.mxu0 0
        %1393 = vmatprep.subr.bf16.mxu0 0
        %1394 = vmatpush1.bf16.msra.mxu0 0
        %1395 = vmatprep.subr.bf16.mxu0 0
        %1396 = vmatpush1.bf16.msra.mxu0 0
        %1397 = vmatprep.subr.bf16.mxu0 0
        %1398 = vmatpush1.bf16.msra.mxu0 0
        %1399 = vmatprep.subr.bf16.mxu0 0
        %1400 = vmatpush1.bf16.msra.mxu0 0
        %1401 = vmatprep.mubr.bf16.mxu0 0
        %1402 = vmatmul.mubr.bf16.gmra.mrb[0].mxu0 %v1361
        %v1403 = vpop.f32.mrb[0].mxu0
        %v1404 = vadd.f32 0.0, %v1403
        %v1405 = vpop.f32.mrb[0].mxu0
        %v1406 = vadd.f32 0.0, %v1405
        %v1407 = vpop.f32.mrb[0].mxu0
        %v1408 = vpop.f32.mrb[0].mxu0
        %1409 = vdwg.mxu0
        %v1411 = vsel %vm428, %v413, 0
        %v1414 = vsel %vm432, %v1351, 0
        %v1417 = vsel %vm432, %v1352, 0
        %1419 = vmatprep.subr.bf16.mxu0 %v1417
        %1420 = vmatpush1.bf16.msra.mxu0 %v1414
        %1421 = vmatprep.subr.bf16.mxu0 0
        %1422 = vmatpush1.bf16.msra.mxu0 0
        %1423 = vmatprep.subr.bf16.mxu0 0
        %1424 = vmatpush1.bf16.msra.mxu0 0
        %1425 = vmatprep.subr.bf16.mxu0 0
        %1426 = vmatpush1.bf16.msra.mxu0 0
        %1427 = vmatprep.subr.bf16.mxu0 0
        %1428 = vmatpush1.bf16.msra.mxu0 0
        %1429 = vmatprep.subr.bf16.mxu0 0
        %1430 = vmatpush1.bf16.msra.mxu0 0
        %1431 = vmatprep.subr.bf16.mxu0 0
        %1432 = vmatpush1.bf16.msra.mxu0 0
        %1433 = vmatprep.subr.bf16.mxu0 0
        %1434 = vmatpush1.bf16.msra.mxu0 0
        %1435 = vmatprep.subr.bf16.mxu0 0
        %1436 = vmatpush1.bf16.msra.mxu0 0
        %1437 = vmatprep.subr.bf16.mxu0 0
        %1438 = vmatpush1.bf16.msra.mxu0 0
        %1439 = vmatprep.subr.bf16.mxu0 0
        %1440 = vmatpush1.bf16.msra.mxu0 0
        %1441 = vmatprep.subr.bf16.mxu0 0
        %1442 = vmatpush1.bf16.msra.mxu0 0
        %1443 = vmatprep.subr.bf16.mxu0 0
        %1444 = vmatpush1.bf16.msra.mxu0 0
        %1445 = vmatprep.subr.bf16.mxu0 0
        %1446 = vmatpush1.bf16.msra.mxu0 0
        %1447 = vmatprep.subr.bf16.mxu0 0
        %1448 = vmatpush1.bf16.msra.mxu0 0
        %1449 = vmatprep.subr.bf16.mxu0 0
        %1450 = vmatpush1.bf16.msra.mxu0 0
        %1451 = vmatprep.mubr.bf16.mxu0 0
        %1452 = vmatmul.mubr.bf16.gmra.mrb[0].mxu0 %v1411
        %v1453 = vpop.f32.mrb[0].mxu0
        %v1454 = vadd.f32 %v1404, %v1453
        %v1455 = vpop.f32.mrb[0].mxu0
        %v1456 = vadd.f32 %v1406, %v1455
        %v1457 = vpop.f32.mrb[0].mxu0
        %v1458 = vpop.f32.mrb[0].mxu0
        %1459 = vdwg.mxu0
        %1461 = vset.pattern.permute.xlu0 0
        %1462 = vperm.xlu0 %1461, %v414
        %v1463 = vpop.permute.xlu0 %1462
        %v1465 = vmul.f32 %v1454, %v1463
        %v1466 = vmul.f32 %v1456, %v1463
        %1468 = vset.pattern.permute.xlu0 0
        %1469 = vperm.xlu0 %1468, %v415
        %v1470 = vpop.permute.xlu0 %1469
        %v1472 = vadd.f32 %v1465, %v1470
        %v1473 = vadd.f32 %v1466, %v1470
        %v1474 = vsub.f32 0.0, %v1472
        %v1475 = vsub.f32 0.0, %v1473
        %v1476 = vmul.f32 %v1474, 1.442695
        %v1477 = vpow.pop %v1476
        %v1478 = vmul.f32 %v1475, 1.442695
        %v1479 = vpow.pop %v1478
        %v1480 = vadd.f32 %v1477, 1.0
        %v1481 = vadd.f32 %v1479, 1.0
        %v1482 = vrcp.pop %v1480
        %v1483 = vmul.f32 %v1472, %v1482
        %v1484 = vrcp.pop %v1481
        %v1485 = vmul.f32 %v1473, %v1484
        %v1486 = vpack.c.bf16 %v1483, %v1483
        %v1487 = vpack.c.bf16 %v1485, %v1485
        %v1490 = vunpack.c.l.b16 %v1486
        %v1491 = vunpack.c.l.b16 %v1487
        %v1492 = vpack.c.b16 %v1491, %v1490
        %1494 = vst [vmem:[%s352] sm:$0xff] %v1492
        %s1495 = sand.u32 %s247, 1
        %s1496 = scalar_lea.sflag [#allocation4], %s1495
        %s1497 = sand.u32 %s247, 1
        %s1498 = smul.addr %s1497, 8
        %s1499 = scalar_lea.vmem [#allocation3], %s1498
        // Predicated region
        $region61: #{tpu_custom_call.1} parent=59 // pred_check
          %p1500 = pneg %p257
        $region62: #{tpu_custom_call.1} parent=59 // pred_check_branch
          %1502 = sbr.rel (%p1500) target = $region64
        $region63: #{tpu_custom_call.1} parent=59 // pred_region
          %s1504 = ssub.s32 128, 128
          %1505 = vsyncadd %s1496, %s1504
          %s1506 = smul.addr %s24, 2
          %s1507 = smul.addr %s1506, 64
          %s1508 = scalar_lea.hbm %s10, %s1507
          %s1510 = sshll.u32 %s1499, 4
          %s1511 = int_to_ptr.vmem [resolvable:$true] %s1510
          %1513 = dma.vmem_to_hbm [thread:$0]  %s1511, 128, %s1508, %s1496
        $region64: #{tpu_custom_call.1} parent=59 // pred_fallthru
          _
      $region60: #{tpu_custom_call.1} parent=5 // pred_fallthru
        _
      %p1514 = scmp.le.s32.totalorder 2, %s19
      // Predicated region
      $region65: #{tpu_custom_call.1} parent=5 // pred_check
        %p1515 = pneg %p1514
      $region66: #{tpu_custom_call.1} parent=5 // pred_check_branch
        %1517 = sbr.rel (%p1515) target = $region68
      $region67: #{tpu_custom_call.1} parent=5 // pred_region
        %s1518 = ssub.s32 %s19, 2
        // Predicated region
        $region69: #{tpu_custom_call.1} parent=67 // pred_check
          %p1519 = pneg %p263
        $region70: #{tpu_custom_call.1} parent=67 // pred_check_branch
          %1521 = sbr.rel (%p1519) target = $region72
        $region71: #{tpu_custom_call.1} parent=67 // pred_region
          %s1522 = sand.u32 %s248, 1
          %s1523 = scalar_lea.sflag [#allocation4], %s1522
          %s1524 = sand.u32 %s248, 1
          %s1525 = smul.addr %s1524, 8
          %s1526 = scalar_lea.vmem [#allocation3], %s1525
          %1527 = dma.done %s1523, 128
        $region72: #{tpu_custom_call.1} parent=67 // pred_fallthru
          _
      $region68: #{tpu_custom_call.1} parent=5 // pred_fallthru
        _
    $region6: #{tpu_custom_call.1} parent=1 // loop_footer
      %s23 = sadd.s32 1, %s19
    $region7: #{tpu_custom_call.1} parent=1 // loop_footer_branch
      %18 = sbr.rel target = $region3
    $region8: #{tpu_custom_call.1} parent=1 // loop_exit
      _
    %1528 = vsyncpa [#allocation4], 1
    %s1529 = scalar_lea.sflag [#allocation4], 1
    %1530 = vsyncpa %s1529, 1

</llo_original>
